<compile_context>
chip_gen: v7x
topology: tpu7x:2x2x1
jax: 0.10.0
libtpu: 0.0.40
codegen_flags: <defaults>
</compile_context>

<pallas_src>
import math
import jax
import jax.numpy as jnp
from jax.experimental import pallas as pl
from jax.experimental.pallas import tpu as pltpu

# ---- static model config (small, consistent with the module) ----
B = 2
KLEN = 8
QLEN = 8
KDIM = 16
QDIM = 16
ADIM = 32
N_HEADS = 4
D_K = ADIM // N_HEADS
ODIM = 32
INV_SCALE = 1.0 / math.sqrt(D_K)
NEG_INF = float(jnp.finfo(jnp.float32).min)


def mha_kernel(key_ref, value_ref, query_ref, mask_ref,
               wk_ref, bk_ref, wv_ref, bv_ref, wq_ref, bq_ref,
               wo_ref, bo_ref,
               cv_ref, aw_ref):
    """Single-step kernel: the whole batch is processed in VMEM."""
    # Whole-batch projections: one MXU matmul per stream (B*len rows each).
    k = jnp.dot(key_ref[...], wk_ref[...], preferred_element_type=jnp.float32) + bk_ref[...]
    v = jnp.dot(value_ref[...], wv_ref[...], preferred_element_type=jnp.float32) + bv_ref[...]
    # Fold the 1/sqrt(d_k) scaling into q once (multiply, not per-head divide).
    q = (jnp.dot(query_ref[...], wq_ref[...], preferred_element_type=jnp.float32)
         + bq_ref[...]) * INV_SCALE

    wo = wo_ref[...]          # (ADIM, ODIM), loaded once
    bo = bo_ref[...]          # (1, ODIM)

    out_rows = []             # per-batch (QLEN, ODIM) results
    aw_rows = []              # per-(batch, head) (QLEN, KLEN) attention weights
    for b in range(B):        # static unroll over batch
        qb = q[b * QLEN:(b + 1) * QLEN, :]     # (QLEN, ADIM)
        kb = k[b * KLEN:(b + 1) * KLEN, :]     # (KLEN, ADIM)
        vb = v[b * KLEN:(b + 1) * KLEN, :]     # (KLEN, ADIM)
        # Mask test hoisted out of the head loop (0 => masked out).
        # NOTE: mask is a {0,1} float32 tensor, same convention as the module.
        masked = mask_ref[b] == 0.0            # (QLEN, KLEN) bool

        out_b = jnp.zeros((QLEN, ODIM), jnp.float32)
        for h in range(N_HEADS):               # static unroll over heads
            sl = slice(h * D_K, (h + 1) * D_K)
            # Scaled-dot energy (scale already folded into q).
            e = jnp.dot(qb[:, sl], kb[:, sl].T, preferred_element_type=jnp.float32)
            # masked_fill_(mask == 0, NEG_INF) -- finite fill like the torch code.
            e = jnp.where(masked, NEG_INF, e)
            # Softmax over klen.
            e_max = jnp.max(e, axis=-1, keepdims=True)
            p = jnp.exp(e - e_max)
            w = p * pl.reciprocal(jnp.sum(p, axis=-1, keepdims=True), approx=True)
            aw_rows.append(w)
            # Fused per-head context + output projection (no lane-dim concat):
            #   cv += (w @ v_h) @ w_out[h*d_k:(h+1)*d_k, :]
            ctx = jnp.dot(w, vb[:, sl], preferred_element_type=jnp.float32)
            out_b = out_b + jnp.dot(ctx, wo[sl, :], preferred_element_type=jnp.float32)
        out_rows.append(out_b + bo)

    # Single store per output (rows = sublane axis; no lane shuffles).
    cv_ref[...] = jnp.concatenate(out_rows, axis=0)      # (B*QLEN, ODIM)
    aw_ref[...] = jnp.concatenate(aw_rows, axis=0)       # (B*N_HEADS*QLEN, KLEN)


def multihead_attention(key, value, query, mask, params):
    """Pallas wrapper. Returns (cv [B,qlen,odim], attn_weight [B,H,qlen,klen])."""
    wk, bk, wv, bv, wq, bq, wo, bo = params

    # Batch is flattened into the row (sublane) dimension so the kernel does
    # one projection matmul per stream for the whole batch.
    key_flat = key.reshape(B * KLEN, KDIM)
    value_flat = value.reshape(B * KLEN, KDIM)
    query_flat = query.reshape(B * QLEN, QDIM)

    vmem = pl.BlockSpec(memory_space=pltpu.MemorySpace.VMEM)
    cv_flat, aw_flat = pl.pallas_call(
        mha_kernel,
        out_shape=(
            jax.ShapeDtypeStruct((B * QLEN, ODIM), jnp.float32),
            jax.ShapeDtypeStruct((B * N_HEADS * QLEN, KLEN), jnp.float32),
        ),
        in_specs=[vmem] * 12,
        out_specs=(vmem, vmem),
    )(key_flat, value_flat, query_flat, mask,
      wk, bk, wv, bv, wq, bq, wo, bo)

    cv = cv_flat.reshape(B, QLEN, ODIM)
    aw = aw_flat.reshape(B, N_HEADS, QLEN, KLEN)
    return cv, aw


def reference(key, value, query, mask, params):
    """Pure-JAX reference mirroring the PyTorch forward (eval mode)."""
    wk, bk, wv, bv, wq, bq, wo, bo = params
    bs = key.shape[0]
    k = (key @ wk + bk).reshape(bs, -1, N_HEADS, D_K)
    v = (value @ wv + bv).reshape(bs, -1, N_HEADS, D_K)
    q = (query @ wq + bq).reshape(bs, -1, N_HEADS, D_K)
    e = jnp.einsum('bihd,bjhd->bijh', q, k) / math.sqrt(D_K)
    m = jnp.repeat(mask[..., None], N_HEADS, axis=3)
    e = jnp.where(m == 0, NEG_INF, e)
    w = jax.nn.softmax(e, axis=2)
    cv = jnp.einsum('bijh,bjhd->bihd', w, v).reshape(bs, -1, ADIM)
    cv = cv @ wo + bo
    return cv, jnp.transpose(w, (0, 3, 1, 2))


def init_params(rng):
    """Deterministic xavier-uniform-ish init (shapes follow the nn.Linear defs)."""
    def xavier(key_, fan_in, fan_out, gain=1.0):
        a = gain * math.sqrt(6.0 / (fan_in + fan_out))
        return jax.random.uniform(key_, (fan_in, fan_out), jnp.float32, -a, a)

    ks = jax.random.split(rng, 8)
    g = 1.0 / math.sqrt(2.0)
    wk = xavier(ks[0], KDIM, ADIM, g)
    wv = xavier(ks[1], KDIM, ADIM, g)
    wq = xavier(ks[2], QDIM, ADIM, g)
    wo = xavier(ks[3], ADIM, ODIM, 1.0)
    bk = 0.01 * jax.random.normal(ks[4], (1, ADIM), jnp.float32)
    bv = 0.01 * jax.random.normal(ks[5], (1, ADIM), jnp.float32)
    bq = 0.01 * jax.random.normal(ks[6], (1, ADIM), jnp.float32)
    bo = 0.01 * jax.random.normal(ks[7], (1, ODIM), jnp.float32)
    return (wk, bk, wv, bv, wq, bq, wo, bo)


if __name__ == "__main__":
    root = jax.random.PRNGKey(0)
    r_key, r_val, r_qry, r_par = jax.random.split(root, 4)

    key = jax.random.normal(r_key, (B, KLEN, KDIM), jnp.float32)
    value = jax.random.normal(r_val, (B, KLEN, KDIM), jnp.float32)
    query = jax.random.normal(r_qry, (B, QLEN, QDIM), jnp.float32)

    # length-style mask: batch 0 attends to all 8 keys, batch 1 to first 6
    lens = jnp.array([KLEN, 6])
    mask = (jnp.arange(KLEN)[None, None, :] < lens[:, None, None]).astype(jnp.float32)
    mask = jnp.broadcast_to(mask, (B, QLEN, KLEN))

    params = init_params(r_par)

    cv, aw = multihead_attention(key, value, query, mask, params)
    jax.block_until_ready((cv, aw))

    cv_ref, aw_ref = reference(key, value, query, mask, params)
    # Tolerances are loosened slightly because the softmax normalizer uses the
    # EUP approximate reciprocal (pl.reciprocal(approx=True)); any structural
    # bug would produce errors orders of magnitude larger.
    assert jnp.allclose(aw, aw_ref, atol=5e-3, rtol=5e-3), "attn_weight mismatch"
    assert jnp.allclose(cv, cv_ref, atol=3e-2, rtol=5e-3), "cv mismatch"

    # TODO(synk): dropout_attn / HeadDrop are training-time stochastic ops; eval mode = identity.
    print("KERNEL_OK")
</pallas_src>

<mosaic_0001>
module attributes {stable_mosaic.version = 11 : i64} {
  func.func @mha_kernel(%arg0: memref<16x16xf32, #tpu.memory_space<vmem>>, %arg1: memref<16x16xf32, #tpu.memory_space<vmem>>, %arg2: memref<16x16xf32, #tpu.memory_space<vmem>>, %arg3: memref<2x8x8xf32, #tpu.memory_space<vmem>>, %arg4: memref<16x32xf32, #tpu.memory_space<vmem>>, %arg5: memref<1x32xf32, #tpu.memory_space<vmem>>, %arg6: memref<16x32xf32, #tpu.memory_space<vmem>>, %arg7: memref<1x32xf32, #tpu.memory_space<vmem>>, %arg8: memref<16x32xf32, #tpu.memory_space<vmem>>, %arg9: memref<1x32xf32, #tpu.memory_space<vmem>>, %arg10: memref<32x32xf32, #tpu.memory_space<vmem>>, %arg11: memref<1x32xf32, #tpu.memory_space<vmem>>, %arg12: memref<16x32xf32, #tpu.memory_space<vmem>>, %arg13: memref<64x8xf32, #tpu.memory_space<vmem>>) attributes {dimension_semantics = [], scalar_prefetch = 0 : i64, scratch_operands = 0 : i64, tpu.core_type = #tpu.core_type<tc>} {
    %c0 = arith.constant 0 : index
    %c0_0 = arith.constant 0 : index
    %0 = vector.load %arg0[%c0, %c0_0] : memref<16x16xf32, #tpu.memory_space<vmem>>, vector<16x16xf32>
    %c0_1 = arith.constant 0 : index
    %c0_2 = arith.constant 0 : index
    %1 = vector.load %arg4[%c0_1, %c0_2] : memref<16x32xf32, #tpu.memory_space<vmem>>, vector<16x32xf32>
    %cst = arith.constant dense<0.000000e+00> : vector<16x32xf32>
    %2 = tpu.matmul %0, %1, %cst {dimension_numbers = #tpu.dot_dimension_numbers<[1], [0], [0], [1], [0, 0, 1, 1], [], []>} : vector<16x16xf32>, vector<16x32xf32>, vector<16x32xf32> -> vector<16x32xf32>
    %c0_3 = arith.constant 0 : index
    %c0_4 = arith.constant 0 : index
    %3 = vector.load %arg5[%c0_3, %c0_4] : memref<1x32xf32, #tpu.memory_space<vmem>>, vector<1x32xf32>
    %4 = vector.broadcast %3 : vector<1x32xf32> to vector<16x32xf32>
    %5 = arith.addf %2, %4 : vector<16x32xf32>
    %c0_5 = arith.constant 0 : index
    %c0_6 = arith.constant 0 : index
    %6 = vector.load %arg1[%c0_5, %c0_6] : memref<16x16xf32, #tpu.memory_space<vmem>>, vector<16x16xf32>
    %c0_7 = arith.constant 0 : index
    %c0_8 = arith.constant 0 : index
    %7 = vector.load %arg6[%c0_7, %c0_8] : memref<16x32xf32, #tpu.memory_space<vmem>>, vector<16x32xf32>
    %cst_9 = arith.constant dense<0.000000e+00> : vector<16x32xf32>
    %8 = tpu.matmul %6, %7, %cst_9 {dimension_numbers = #tpu.dot_dimension_numbers<[1], [0], [0], [1], [0, 0, 1, 1], [], []>} : vector<16x16xf32>, vector<16x32xf32>, vector<16x32xf32> -> vector<16x32xf32>
    %c0_10 = arith.constant 0 : index
    %c0_11 = arith.constant 0 : index
    %9 = vector.load %arg7[%c0_10, %c0_11] : memref<1x32xf32, #tpu.memory_space<vmem>>, vector<1x32xf32>
    %10 = vector.broadcast %9 : vector<1x32xf32> to vector<16x32xf32>
    %11 = arith.addf %8, %10 : vector<16x32xf32>
    %c0_12 = arith.constant 0 : index
    %c0_13 = arith.constant 0 : index
    %12 = vector.load %arg2[%c0_12, %c0_13] : memref<16x16xf32, #tpu.memory_space<vmem>>, vector<16x16xf32>
    %c0_14 = arith.constant 0 : index
    %c0_15 = arith.constant 0 : index
    %13 = vector.load %arg8[%c0_14, %c0_15] : memref<16x32xf32, #tpu.memory_space<vmem>>, vector<16x32xf32>
    %cst_16 = arith.constant dense<0.000000e+00> : vector<16x32xf32>
    %14 = tpu.matmul %12, %13, %cst_16 {dimension_numbers = #tpu.dot_dimension_numbers<[1], [0], [0], [1], [0, 0, 1, 1], [], []>} : vector<16x16xf32>, vector<16x32xf32>, vector<16x32xf32> -> vector<16x32xf32>
    %c0_17 = arith.constant 0 : index
    %c0_18 = arith.constant 0 : index
    %15 = vector.load %arg9[%c0_17, %c0_18] : memref<1x32xf32, #tpu.memory_space<vmem>>, vector<1x32xf32>
    %16 = vector.broadcast %15 : vector<1x32xf32> to vector<16x32xf32>
    %17 = arith.addf %14, %16 : vector<16x32xf32>
    %cst_19 = arith.constant 0.353553385 : f32
    %18 = vector.broadcast %cst_19 : f32 to vector<16x32xf32>
    %19 = arith.mulf %17, %18 : vector<16x32xf32>
    %c0_20 = arith.constant 0 : index
    %c0_21 = arith.constant 0 : index
    %20 = vector.load %arg10[%c0_20, %c0_21] : memref<32x32xf32, #tpu.memory_space<vmem>>, vector<32x32xf32>
    %c0_22 = arith.constant 0 : index
    %c0_23 = arith.constant 0 : index
    %21 = vector.load %arg11[%c0_22, %c0_23] : memref<1x32xf32, #tpu.memory_space<vmem>>, vector<1x32xf32>
    %22 = vector.extract_strided_slice %19 {offsets = [0, 0], sizes = [8, 32], strides = [1, 1]} : vector<16x32xf32> to vector<8x32xf32>
    %23 = vector.extract_strided_slice %5 {offsets = [0, 0], sizes = [8, 32], strides = [1, 1]} : vector<16x32xf32> to vector<8x32xf32>
    %24 = vector.extract_strided_slice %11 {offsets = [0, 0], sizes = [8, 32], strides = [1, 1]} : vector<16x32xf32> to vector<8x32xf32>
    %c0_24 = arith.constant 0 : index
    %c0_25 = arith.constant 0 : index
    %c0_26 = arith.constant 0 : index
    %25 = vector.load %arg3[%c0_24, %c0_25, %c0_26] : memref<2x8x8xf32, #tpu.memory_space<vmem>>, vector<1x8x8xf32>
    %26 = vector.shape_cast %25 : vector<1x8x8xf32> to vector<8x8xf32>
    %cst_27 = arith.constant 0.000000e+00 : f32
    %27 = vector.broadcast %cst_27 : f32 to vector<8x8xf32>
    %28 = arith.cmpf oeq, %26, %27 : vector<8x8xf32>
    %cst_28 = arith.constant 0.000000e+00 : f32
    %29 = vector.broadcast %cst_28 : f32 to vector<8x32xf32>
    %30 = vector.extract_strided_slice %22 {offsets = [0, 0], sizes = [8, 8], strides = [1, 1]} : vector<8x32xf32> to vector<8x8xf32>
    %31 = vector.extract_strided_slice %23 {offsets = [0, 0], sizes = [8, 8], strides = [1, 1]} : vector<8x32xf32> to vector<8x8xf32>
    %32 = tpu.transpose %31, [1, 0] : vector<8x8xf32> -> vector<8x8xf32>
    %cst_29 = arith.constant dense<0.000000e+00> : vector<8x8xf32>
    %33 = tpu.matmul %30, %32, %cst_29 {dimension_numbers = #tpu.dot_dimension_numbers<[1], [0], [0], [1], [0, 0, 1, 1], [], []>} : vector<8x8xf32>, vector<8x8xf32>, vector<8x8xf32> -> vector<8x8xf32>
    %cst_30 = arith.constant -3.40282347E+38 : f32
    %34 = vector.broadcast %cst_30 : f32 to vector<8x8xf32>
    %35 = arith.select %28, %34, %33 : vector<8x8xi1>, vector<8x8xf32>
    %cst_31 = arith.constant dense<0xFF800000> : vector<8xf32>
    %36 = vector.multi_reduction <maximumf>, %35, %cst_31 [1] : vector<8x8xf32> to vector<8xf32>
    %37 = vector.shape_cast %36 : vector<8xf32> to vector<8x1xf32>
    %38 = vector.broadcast %37 : vector<8x1xf32> to vector<8x8xf32>
    %39 = arith.subf %35, %38 : vector<8x8xf32>
    %40 = math.exp %39 : vector<8x8xf32>
    %cst_32 = arith.constant dense<0.000000e+00> : vector<8xf32>
    %41 = vector.multi_reduction <add>, %40, %cst_32 [1] : vector<8x8xf32> to vector<8xf32>
    %42 = vector.shape_cast %41 : vector<8xf32> to vector<8x1xf32>
    %43 = tpu.reciprocal %42 {approx = true} : vector<8x1xf32> -> vector<8x1xf32>
    %44 = vector.broadcast %43 : vector<8x1xf32> to vector<8x8xf32>
    %45 = arith.mulf %40, %44 : vector<8x8xf32>
    %46 = vector.extract_strided_slice %24 {offsets = [0, 0], sizes = [8, 8], strides = [1, 1]} : vector<8x32xf32> to vector<8x8xf32>
    %cst_33 = arith.constant dense<0.000000e+00> : vector<8x8xf32>
    %47 = tpu.matmul %45, %46, %cst_33 {dimension_numbers = #tpu.dot_dimension_numbers<[1], [0], [0], [1], [0, 0, 1, 1], [], []>} : vector<8x8xf32>, vector<8x8xf32>, vector<8x8xf32> -> vector<8x8xf32>
    %48 = vector.extract_strided_slice %20 {offsets = [0, 0], sizes = [8, 32], strides = [1, 1]} : vector<32x32xf32> to vector<8x32xf32>
    %cst_34 = arith.constant dense<0.000000e+00> : vector<8x32xf32>
    %49 = tpu.matmul %47, %48, %cst_34 {dimension_numbers = #tpu.dot_dimension_numbers<[1], [0], [0], [1], [0, 0, 1, 1], [], []>} : vector<8x8xf32>, vector<8x32xf32>, vector<8x32xf32> -> vector<8x32xf32>
    %50 = arith.addf %29, %49 : vector<8x32xf32>
    %51 = vector.extract_strided_slice %22 {offsets = [0, 8], sizes = [8, 8], strides = [1, 1]} : vector<8x32xf32> to vector<8x8xf32>
    %52 = vector.extract_strided_slice %23 {offsets = [0, 8], sizes = [8, 8], strides = [1, 1]} : vector<8x32xf32> to vector<8x8xf32>
    %53 = tpu.transpose %52, [1, 0] : vector<8x8xf32> -> vector<8x8xf32>
    %cst_35 = arith.constant dense<0.000000e+00> : vector<8x8xf32>
    %54 = tpu.matmul %51, %53, %cst_35 {dimension_numbers = #tpu.dot_dimension_numbers<[1], [0], [0], [1], [0, 0, 1, 1], [], []>} : vector<8x8xf32>, vector<8x8xf32>, vector<8x8xf32> -> vector<8x8xf32>
    %cst_36 = arith.constant -3.40282347E+38 : f32
    %55 = vector.broadcast %cst_36 : f32 to vector<8x8xf32>
    %56 = arith.select %28, %55, %54 : vector<8x8xi1>, vector<8x8xf32>
    %cst_37 = arith.constant dense<0xFF800000> : vector<8xf32>
    %57 = vector.multi_reduction <maximumf>, %56, %cst_37 [1] : vector<8x8xf32> to vector<8xf32>
    %58 = vector.shape_cast %57 : vector<8xf32> to vector<8x1xf32>
    %59 = vector.broadcast %58 : vector<8x1xf32> to vector<8x8xf32>
    %60 = arith.subf %56, %59 : vector<8x8xf32>
    %61 = math.exp %60 : vector<8x8xf32>
    %cst_38 = arith.constant dense<0.000000e+00> : vector<8xf32>
    %62 = vector.multi_reduction <add>, %61, %cst_38 [1] : vector<8x8xf32> to vector<8xf32>
    %63 = vector.shape_cast %62 : vector<8xf32> to vector<8x1xf32>
    %64 = tpu.reciprocal %63 {approx = true} : vector<8x1xf32> -> vector<8x1xf32>
    %65 = vector.broadcast %64 : vector<8x1xf32> to vector<8x8xf32>
    %66 = arith.mulf %61, %65 : vector<8x8xf32>
    %67 = vector.extract_strided_slice %24 {offsets = [0, 8], sizes = [8, 8], strides = [1, 1]} : vector<8x32xf32> to vector<8x8xf32>
    %cst_39 = arith.constant dense<0.000000e+00> : vector<8x8xf32>
    %68 = tpu.matmul %66, %67, %cst_39 {dimension_numbers = #tpu.dot_dimension_numbers<[1], [0], [0], [1], [0, 0, 1, 1], [], []>} : vector<8x8xf32>, vector<8x8xf32>, vector<8x8xf32> -> vector<8x8xf32>
    %69 = vector.extract_strided_slice %20 {offsets = [8, 0], sizes = [8, 32], strides = [1, 1]} : vector<32x32xf32> to vector<8x32xf32>
    %cst_40 = arith.constant dense<0.000000e+00> : vector<8x32xf32>
    %70 = tpu.matmul %68, %69, %cst_40 {dimension_numbers = #tpu.dot_dimension_numbers<[1], [0], [0], [1], [0, 0, 1, 1], [], []>} : vector<8x8xf32>, vector<8x32xf32>, vector<8x32xf32> -> vector<8x32xf32>
    %71 = arith.addf %50, %70 : vector<8x32xf32>
    %72 = vector.extract_strided_slice %22 {offsets = [0, 16], sizes = [8, 8], strides = [1, 1]} : vector<8x32xf32> to vector<8x8xf32>
    %73 = vector.extract_strided_slice %23 {offsets = [0, 16], sizes = [8, 8], strides = [1, 1]} : vector<8x32xf32> to vector<8x8xf32>
    %74 = tpu.transpose %73, [1, 0] : vector<8x8xf32> -> vector<8x8xf32>
    %cst_41 = arith.constant dense<0.000000e+00> : vector<8x8xf32>
    %75 = tpu.matmul %72, %74, %cst_41 {dimension_numbers = #tpu.dot_dimension_numbers<[1], [0], [0], [1], [0, 0, 1, 1], [], []>} : vector<8x8xf32>, vector<8x8xf32>, vector<8x8xf32> -> vector<8x8xf32>
    %cst_42 = arith.constant -3.40282347E+38 : f32
    %76 = vector.broadcast %cst_42 : f32 to vector<8x8xf32>
    %77 = arith.select %28, %76, %75 : vector<8x8xi1>, vector<8x8xf32>
    %cst_43 = arith.constant dense<0xFF800000> : vector<8xf32>
    %78 = vector.multi_reduction <maximumf>, %77, %cst_43 [1] : vector<8x8xf32> to vector<8xf32>
    %79 = vector.shape_cast %78 : vector<8xf32> to vector<8x1xf32>
    %80 = vector.broadcast %79 : vector<8x1xf32> to vector<8x8xf32>
    %81 = arith.subf %77, %80 : vector<8x8xf32>
    %82 = math.exp %81 : vector<8x8xf32>
    %cst_44 = arith.constant dense<0.000000e+00> : vector<8xf32>
    %83 = vector.multi_reduction <add>, %82, %cst_44 [1] : vector<8x8xf32> to vector<8xf32>
    %84 = vector.shape_cast %83 : vector<8xf32> to vector<8x1xf32>
    %85 = tpu.reciprocal %84 {approx = true} : vector<8x1xf32> -> vector<8x1xf32>
    %86 = vector.broadcast %85 : vector<8x1xf32> to vector<8x8xf32>
    %87 = arith.mulf %82, %86 : vector<8x8xf32>
    %88 = vector.extract_strided_slice %24 {offsets = [0, 16], sizes = [8, 8], strides = [1, 1]} : vector<8x32xf32> to vector<8x8xf32>
    %cst_45 = arith.constant dense<0.000000e+00> : vector<8x8xf32>
    %89 = tpu.matmul %87, %88, %cst_45 {dimension_numbers = #tpu.dot_dimension_numbers<[1], [0], [0], [1], [0, 0, 1, 1], [], []>} : vector<8x8xf32>, vector<8x8xf32>, vector<8x8xf32> -> vector<8x8xf32>
    %90 = vector.extract_strided_slice %20 {offsets = [16, 0], sizes = [8, 32], strides = [1, 1]} : vector<32x32xf32> to vector<8x32xf32>
    %cst_46 = arith.constant dense<0.000000e+00> : vector<8x32xf32>
    %91 = tpu.matmul %89, %90, %cst_46 {dimension_numbers = #tpu.dot_dimension_numbers<[1], [0], [0], [1], [0, 0, 1, 1], [], []>} : vector<8x8xf32>, vector<8x32xf32>, vector<8x32xf32> -> vector<8x32xf32>
    %92 = arith.addf %71, %91 : vector<8x32xf32>
    %93 = vector.extract_strided_slice %22 {offsets = [0, 24], sizes = [8, 8], strides = [1, 1]} : vector<8x32xf32> to vector<8x8xf32>
    %94 = vector.extract_strided_slice %23 {offsets = [0, 24], sizes = [8, 8], strides = [1, 1]} : vector<8x32xf32> to vector<8x8xf32>
    %95 = tpu.transpose %94, [1, 0] : vector<8x8xf32> -> vector<8x8xf32>
    %cst_47 = arith.constant dense<0.000000e+00> : vector<8x8xf32>
    %96 = tpu.matmul %93, %95, %cst_47 {dimension_numbers = #tpu.dot_dimension_numbers<[1], [0], [0], [1], [0, 0, 1, 1], [], []>} : vector<8x8xf32>, vector<8x8xf32>, vector<8x8xf32> -> vector<8x8xf32>
    %cst_48 = arith.constant -3.40282347E+38 : f32
    %97 = vector.broadcast %cst_48 : f32 to vector<8x8xf32>
    %98 = arith.select %28, %97, %96 : vector<8x8xi1>, vector<8x8xf32>
    %cst_49 = arith.constant dense<0xFF800000> : vector<8xf32>
    %99 = vector.multi_reduction <maximumf>, %98, %cst_49 [1] : vector<8x8xf32> to vector<8xf32>
    %100 = vector.shape_cast %99 : vector<8xf32> to vector<8x1xf32>
    %101 = vector.broadcast %100 : vector<8x1xf32> to vector<8x8xf32>
    %102 = arith.subf %98, %101 : vector<8x8xf32>
    %103 = math.exp %102 : vector<8x8xf32>
    %cst_50 = arith.constant dense<0.000000e+00> : vector<8xf32>
    %104 = vector.multi_reduction <add>, %103, %cst_50 [1] : vector<8x8xf32> to vector<8xf32>
    %105 = vector.shape_cast %104 : vector<8xf32> to vector<8x1xf32>
    %106 = tpu.reciprocal %105 {approx = true} : vector<8x1xf32> -> vector<8x1xf32>
    %107 = vector.broadcast %106 : vector<8x1xf32> to vector<8x8xf32>
    %108 = arith.mulf %103, %107 : vector<8x8xf32>
    %109 = vector.extract_strided_slice %24 {offsets = [0, 24], sizes = [8, 8], strides = [1, 1]} : vector<8x32xf32> to vector<8x8xf32>
    %cst_51 = arith.constant dense<0.000000e+00> : vector<8x8xf32>
    %110 = tpu.matmul %108, %109, %cst_51 {dimension_numbers = #tpu.dot_dimension_numbers<[1], [0], [0], [1], [0, 0, 1, 1], [], []>} : vector<8x8xf32>, vector<8x8xf32>, vector<8x8xf32> -> vector<8x8xf32>
    %111 = vector.extract_strided_slice %20 {offsets = [24, 0], sizes = [8, 32], strides = [1, 1]} : vector<32x32xf32> to vector<8x32xf32>
    %cst_52 = arith.constant dense<0.000000e+00> : vector<8x32xf32>
    %112 = tpu.matmul %110, %111, %cst_52 {dimension_numbers = #tpu.dot_dimension_numbers<[1], [0], [0], [1], [0, 0, 1, 1], [], []>} : vector<8x8xf32>, vector<8x32xf32>, vector<8x32xf32> -> vector<8x32xf32>
    %113 = arith.addf %92, %112 : vector<8x32xf32>
    %114 = vector.broadcast %21 : vector<1x32xf32> to vector<8x32xf32>
    %115 = arith.addf %113, %114 : vector<8x32xf32>
    %116 = vector.extract_strided_slice %19 {offsets = [8, 0], sizes = [8, 32], strides = [1, 1]} : vector<16x32xf32> to vector<8x32xf32>
    %117 = vector.extract_strided_slice %5 {offsets = [8, 0], sizes = [8, 32], strides = [1, 1]} : vector<16x32xf32> to vector<8x32xf32>
    %118 = vector.extract_strided_slice %11 {offsets = [8, 0], sizes = [8, 32], strides = [1, 1]} : vector<16x32xf32> to vector<8x32xf32>
    %c1 = arith.constant 1 : index
    %c0_53 = arith.constant 0 : index
    %c0_54 = arith.constant 0 : index
    %119 = vector.load %arg3[%c1, %c0_53, %c0_54] : memref<2x8x8xf32, #tpu.memory_space<vmem>>, vector<1x8x8xf32>
    %120 = vector.shape_cast %119 : vector<1x8x8xf32> to vector<8x8xf32>
    %cst_55 = arith.constant 0.000000e+00 : f32
    %121 = vector.broadcast %cst_55 : f32 to vector<8x8xf32>
    %122 = arith.cmpf oeq, %120, %121 : vector<8x8xf32>
    %cst_56 = arith.constant 0.000000e+00 : f32
    %123 = vector.broadcast %cst_56 : f32 to vector<8x32xf32>
    %124 = vector.extract_strided_slice %116 {offsets = [0, 0], sizes = [8, 8], strides = [1, 1]} : vector<8x32xf32> to vector<8x8xf32>
    %125 = vector.extract_strided_slice %117 {offsets = [0, 0], sizes = [8, 8], strides = [1, 1]} : vector<8x32xf32> to vector<8x8xf32>
    %126 = tpu.transpose %125, [1, 0] : vector<8x8xf32> -> vector<8x8xf32>
    %cst_57 = arith.constant dense<0.000000e+00> : vector<8x8xf32>
    %127 = tpu.matmul %124, %126, %cst_57 {dimension_numbers = #tpu.dot_dimension_numbers<[1], [0], [0], [1], [0, 0, 1, 1], [], []>} : vector<8x8xf32>, vector<8x8xf32>, vector<8x8xf32> -> vector<8x8xf32>
    %cst_58 = arith.constant -3.40282347E+38 : f32
    %128 = vector.broadcast %cst_58 : f32 to vector<8x8xf32>
    %129 = arith.select %122, %128, %127 : vector<8x8xi1>, vector<8x8xf32>
    %cst_59 = arith.constant dense<0xFF800000> : vector<8xf32>
    %130 = vector.multi_reduction <maximumf>, %129, %cst_59 [1] : vector<8x8xf32> to vector<8xf32>
    %131 = vector.shape_cast %130 : vector<8xf32> to vector<8x1xf32>
    %132 = vector.broadcast %131 : vector<8x1xf32> to vector<8x8xf32>
    %133 = arith.subf %129, %132 : vector<8x8xf32>
    %134 = math.exp %133 : vector<8x8xf32>
    %cst_60 = arith.constant dense<0.000000e+00> : vector<8xf32>
    %135 = vector.multi_reduction <add>, %134, %cst_60 [1] : vector<8x8xf32> to vector<8xf32>
    %136 = vector.shape_cast %135 : vector<8xf32> to vector<8x1xf32>
    %137 = tpu.reciprocal %136 {approx = true} : vector<8x1xf32> -> vector<8x1xf32>
    %138 = vector.broadcast %137 : vector<8x1xf32> to vector<8x8xf32>
    %139 = arith.mulf %134, %138 : vector<8x8xf32>
    %140 = vector.extract_strided_slice %118 {offsets = [0, 0], sizes = [8, 8], strides = [1, 1]} : vector<8x32xf32> to vector<8x8xf32>
    %cst_61 = arith.constant dense<0.000000e+00> : vector<8x8xf32>
    %141 = tpu.matmul %139, %140, %cst_61 {dimension_numbers = #tpu.dot_dimension_numbers<[1], [0], [0], [1], [0, 0, 1, 1], [], []>} : vector<8x8xf32>, vector<8x8xf32>, vector<8x8xf32> -> vector<8x8xf32>
    %142 = vector.extract_strided_slice %20 {offsets = [0, 0], sizes = [8, 32], strides = [1, 1]} : vector<32x32xf32> to vector<8x32xf32>
    %cst_62 = arith.constant dense<0.000000e+00> : vector<8x32xf32>
    %143 = tpu.matmul %141, %142, %cst_62 {dimension_numbers = #tpu.dot_dimension_numbers<[1], [0], [0], [1], [0, 0, 1, 1], [], []>} : vector<8x8xf32>, vector<8x32xf32>, vector<8x32xf32> -> vector<8x32xf32>
    %144 = arith.addf %123, %143 : vector<8x32xf32>
    %145 = vector.extract_strided_slice %116 {offsets = [0, 8], sizes = [8, 8], strides = [1, 1]} : vector<8x32xf32> to vector<8x8xf32>
    %146 = vector.extract_strided_slice %117 {offsets = [0, 8], sizes = [8, 8], strides = [1, 1]} : vector<8x32xf32> to vector<8x8xf32>
    %147 = tpu.transpose %146, [1, 0] : vector<8x8xf32> -> vector<8x8xf32>
    %cst_63 = arith.constant dense<0.000000e+00> : vector<8x8xf32>
    %148 = tpu.matmul %145, %147, %cst_63 {dimension_numbers = #tpu.dot_dimension_numbers<[1], [0], [0], [1], [0, 0, 1, 1], [], []>} : vector<8x8xf32>, vector<8x8xf32>, vector<8x8xf32> -> vector<8x8xf32>
    %cst_64 = arith.constant -3.40282347E+38 : f32
    %149 = vector.broadcast %cst_64 : f32 to vector<8x8xf32>
    %150 = arith.select %122, %149, %148 : vector<8x8xi1>, vector<8x8xf32>
    %cst_65 = arith.constant dense<0xFF800000> : vector<8xf32>
    %151 = vector.multi_reduction <maximumf>, %150, %cst_65 [1] : vector<8x8xf32> to vector<8xf32>
    %152 = vector.shape_cast %151 : vector<8xf32> to vector<8x1xf32>
    %153 = vector.broadcast %152 : vector<8x1xf32> to vector<8x8xf32>
    %154 = arith.subf %150, %153 : vector<8x8xf32>
    %155 = math.exp %154 : vector<8x8xf32>
    %cst_66 = arith.constant dense<0.000000e+00> : vector<8xf32>
    %156 = vector.multi_reduction <add>, %155, %cst_66 [1] : vector<8x8xf32> to vector<8xf32>
    %157 = vector.shape_cast %156 : vector<8xf32> to vector<8x1xf32>
    %158 = tpu.reciprocal %157 {approx = true} : vector<8x1xf32> -> vector<8x1xf32>
    %159 = vector.broadcast %158 : vector<8x1xf32> to vector<8x8xf32>
    %160 = arith.mulf %155, %159 : vector<8x8xf32>
    %161 = vector.extract_strided_slice %118 {offsets = [0, 8], sizes = [8, 8], strides = [1, 1]} : vector<8x32xf32> to vector<8x8xf32>
    %cst_67 = arith.constant dense<0.000000e+00> : vector<8x8xf32>
    %162 = tpu.matmul %160, %161, %cst_67 {dimension_numbers = #tpu.dot_dimension_numbers<[1], [0], [0], [1], [0, 0, 1, 1], [], []>} : vector<8x8xf32>, vector<8x8xf32>, vector<8x8xf32> -> vector<8x8xf32>
    %163 = vector.extract_strided_slice %20 {offsets = [8, 0], sizes = [8, 32], strides = [1, 1]} : vector<32x32xf32> to vector<8x32xf32>
    %cst_68 = arith.constant dense<0.000000e+00> : vector<8x32xf32>
    %164 = tpu.matmul %162, %163, %cst_68 {dimension_numbers = #tpu.dot_dimension_numbers<[1], [0], [0], [1], [0, 0, 1, 1], [], []>} : vector<8x8xf32>, vector<8x32xf32>, vector<8x32xf32> -> vector<8x32xf32>
    %165 = arith.addf %144, %164 : vector<8x32xf32>
    %166 = vector.extract_strided_slice %116 {offsets = [0, 16], sizes = [8, 8], strides = [1, 1]} : vector<8x32xf32> to vector<8x8xf32>
    %167 = vector.extract_strided_slice %117 {offsets = [0, 16], sizes = [8, 8], strides = [1, 1]} : vector<8x32xf32> to vector<8x8xf32>
    %168 = tpu.transpose %167, [1, 0] : vector<8x8xf32> -> vector<8x8xf32>
    %cst_69 = arith.constant dense<0.000000e+00> : vector<8x8xf32>
    %169 = tpu.matmul %166, %168, %cst_69 {dimension_numbers = #tpu.dot_dimension_numbers<[1], [0], [0], [1], [0, 0, 1, 1], [], []>} : vector<8x8xf32>, vector<8x8xf32>, vector<8x8xf32> -> vector<8x8xf32>
    %cst_70 = arith.constant -3.40282347E+38 : f32
    %170 = vector.broadcast %cst_70 : f32 to vector<8x8xf32>
    %171 = arith.select %122, %170, %169 : vector<8x8xi1>, vector<8x8xf32>
    %cst_71 = arith.constant dense<0xFF800000> : vector<8xf32>
    %172 = vector.multi_reduction <maximumf>, %171, %cst_71 [1] : vector<8x8xf32> to vector<8xf32>
    %173 = vector.shape_cast %172 : vector<8xf32> to vector<8x1xf32>
    %174 = vector.broadcast %173 : vector<8x1xf32> to vector<8x8xf32>
    %175 = arith.subf %171, %174 : vector<8x8xf32>
    %176 = math.exp %175 : vector<8x8xf32>
    %cst_72 = arith.constant dense<0.000000e+00> : vector<8xf32>
    %177 = vector.multi_reduction <add>, %176, %cst_72 [1] : vector<8x8xf32> to vector<8xf32>
    %178 = vector.shape_cast %177 : vector<8xf32> to vector<8x1xf32>
    %179 = tpu.reciprocal %178 {approx = true} : vector<8x1xf32> -> vector<8x1xf32>
    %180 = vector.broadcast %179 : vector<8x1xf32> to vector<8x8xf32>
    %181 = arith.mulf %176, %180 : vector<8x8xf32>
    %182 = vector.extract_strided_slice %118 {offsets = [0, 16], sizes = [8, 8], strides = [1, 1]} : vector<8x32xf32> to vector<8x8xf32>
    %cst_73 = arith.constant dense<0.000000e+00> : vector<8x8xf32>
    %183 = tpu.matmul %181, %182, %cst_73 {dimension_numbers = #tpu.dot_dimension_numbers<[1], [0], [0], [1], [0, 0, 1, 1], [], []>} : vector<8x8xf32>, vector<8x8xf32>, vector<8x8xf32> -> vector<8x8xf32>
    %184 = vector.extract_strided_slice %20 {offsets = [16, 0], sizes = [8, 32], strides = [1, 1]} : vector<32x32xf32> to vector<8x32xf32>
    %cst_74 = arith.constant dense<0.000000e+00> : vector<8x32xf32>
    %185 = tpu.matmul %183, %184, %cst_74 {dimension_numbers = #tpu.dot_dimension_numbers<[1], [0], [0], [1], [0, 0, 1, 1], [], []>} : vector<8x8xf32>, vector<8x32xf32>, vector<8x32xf32> -> vector<8x32xf32>
    %186 = arith.addf %165, %185 : vector<8x32xf32>
    %187 = vector.extract_strided_slice %116 {offsets = [0, 24], sizes = [8, 8], strides = [1, 1]} : vector<8x32xf32> to vector<8x8xf32>
    %188 = vector.extract_strided_slice %117 {offsets = [0, 24], sizes = [8, 8], strides = [1, 1]} : vector<8x32xf32> to vector<8x8xf32>
    %189 = tpu.transpose %188, [1, 0] : vector<8x8xf32> -> vector<8x8xf32>
    %cst_75 = arith.constant dense<0.000000e+00> : vector<8x8xf32>
    %190 = tpu.matmul %187, %189, %cst_75 {dimension_numbers = #tpu.dot_dimension_numbers<[1], [0], [0], [1], [0, 0, 1, 1], [], []>} : vector<8x8xf32>, vector<8x8xf32>, vector<8x8xf32> -> vector<8x8xf32>
    %cst_76 = arith.constant -3.40282347E+38 : f32
    %191 = vector.broadcast %cst_76 : f32 to vector<8x8xf32>
    %192 = arith.select %122, %191, %190 : vector<8x8xi1>, vector<8x8xf32>
    %cst_77 = arith.constant dense<0xFF800000> : vector<8xf32>
    %193 = vector.multi_reduction <maximumf>, %192, %cst_77 [1] : vector<8x8xf32> to vector<8xf32>
    %194 = vector.shape_cast %193 : vector<8xf32> to vector<8x1xf32>
    %195 = vector.broadcast %194 : vector<8x1xf32> to vector<8x8xf32>
    %196 = arith.subf %192, %195 : vector<8x8xf32>
    %197 = math.exp %196 : vector<8x8xf32>
    %cst_78 = arith.constant dense<0.000000e+00> : vector<8xf32>
    %198 = vector.multi_reduction <add>, %197, %cst_78 [1] : vector<8x8xf32> to vector<8xf32>
    %199 = vector.shape_cast %198 : vector<8xf32> to vector<8x1xf32>
    %200 = tpu.reciprocal %199 {approx = true} : vector<8x1xf32> -> vector<8x1xf32>
    %201 = vector.broadcast %200 : vector<8x1xf32> to vector<8x8xf32>
    %202 = arith.mulf %197, %201 : vector<8x8xf32>
    %203 = vector.extract_strided_slice %118 {offsets = [0, 24], sizes = [8, 8], strides = [1, 1]} : vector<8x32xf32> to vector<8x8xf32>
    %cst_79 = arith.constant dense<0.000000e+00> : vector<8x8xf32>
    %204 = tpu.matmul %202, %203, %cst_79 {dimension_numbers = #tpu.dot_dimension_numbers<[1], [0], [0], [1], [0, 0, 1, 1], [], []>} : vector<8x8xf32>, vector<8x8xf32>, vector<8x8xf32> -> vector<8x8xf32>
    %205 = vector.extract_strided_slice %20 {offsets = [24, 0], sizes = [8, 32], strides = [1, 1]} : vector<32x32xf32> to vector<8x32xf32>
    %cst_80 = arith.constant dense<0.000000e+00> : vector<8x32xf32>
    %206 = tpu.matmul %204, %205, %cst_80 {dimension_numbers = #tpu.dot_dimension_numbers<[1], [0], [0], [1], [0, 0, 1, 1], [], []>} : vector<8x8xf32>, vector<8x32xf32>, vector<8x32xf32> -> vector<8x32xf32>
    %207 = arith.addf %186, %206 : vector<8x32xf32>
    %208 = vector.broadcast %21 : vector<1x32xf32> to vector<8x32xf32>
    %209 = arith.addf %207, %208 : vector<8x32xf32>
    %210 = tpu.concatenate %115, %209 in 0 : vector<8x32xf32>, vector<8x32xf32> -> vector<16x32xf32>
    %c0_81 = arith.constant 0 : index
    %c0_82 = arith.constant 0 : index
    %211 = vector.load %arg12[%c0_81, %c0_82] : memref<16x32xf32, #tpu.memory_space<vmem>>, vector<16x32xf32>
    tpu.vector_store %arg12[%c0_81, %c0_82], %210 {strides = array<i32>} : memref<16x32xf32, #tpu.memory_space<vmem>>, vector<16x32xf32>,
    %212 = tpu.concatenate %45, %66, %87, %108, %139, %160, %181, %202 in 0 : vector<8x8xf32>, vector<8x8xf32>, vector<8x8xf32>, vector<8x8xf32>, vector<8x8xf32>, vector<8x8xf32>, vector<8x8xf32>, vector<8x8xf32> -> vector<64x8xf32>
    %c0_83 = arith.constant 0 : index
    %c0_84 = arith.constant 0 : index
    %213 = vector.load %arg13[%c0_83, %c0_84] : memref<64x8xf32, #tpu.memory_space<vmem>>, vector<64x8xf32>
    tpu.vector_store %arg13[%c0_83, %c0_84], %212 {strides = array<i32>} : memref<64x8xf32, #tpu.memory_space<vmem>>, vector<64x8xf32>,
    return
  }
}

</mosaic_0001>

<llo_original>
// kernel: tpu_custom_call.1
$region0: #{tpu_custom_call.1}
  #allocation0 [shape = 'u32[]', space=smem, size = 0x4, offset = 0x4, fixed_abs, tag = 'smem constant byte address 0x4 - core index']
  #allocation1 [shape = 'u32[144,128]{1,0:T(1,128)}', space=vmem, size = 0x12000, scoped, tag = 'internal scratch']
  %s0 = inlined_call_operand.hbm [shape: f32[16,16], index: 0, kind: input, shape index: {}]
  %s1 = inlined_call_operand.hbm [shape: f32[16,16], index: 1, kind: input, shape index: {}]
  %s2 = inlined_call_operand.hbm [shape: f32[16,16], index: 2, kind: input, shape index: {}]
  %s3 = inlined_call_operand.hbm [shape: f32[2,8,8], index: 3, kind: input, shape index: {}]
  %s4 = inlined_call_operand.hbm [shape: f32[16,32], index: 4, kind: input, shape index: {}]
  %s5 = inlined_call_operand.vmem [shape: f32[1,32], index: 5, kind: input, shape index: {}]
  %s6 = inlined_call_operand.hbm [shape: f32[16,32], index: 6, kind: input, shape index: {}]
  %s7 = inlined_call_operand.vmem [shape: f32[1,32], index: 7, kind: input, shape index: {}]
  %s8 = inlined_call_operand.hbm [shape: f32[16,32], index: 8, kind: input, shape index: {}]
  %s9 = inlined_call_operand.vmem [shape: f32[1,32], index: 9, kind: input, shape index: {}]
  %s10 = inlined_call_operand.vmem [shape: f32[32,32], index: 10, kind: input, shape index: {}]
  %s11 = inlined_call_operand.vmem [shape: f32[1,32], index: 11, kind: input, shape index: {}]
  %s12 = inlined_call_operand.hbm [shape: f32[16,32], index: 12, kind: output, shape index: {0}]
  %s13 = inlined_call_operand.vmem [shape: f32[64,8], index: 13, kind: output, shape index: {1}]
  %14 = xla_tuple %s12, %s13
  %s15 = sld [smem:[#allocation0]]
  $region94: #{tpu_custom_call.1} parent=0
    _
  %s17 = ssub.s32 1, %s15
  %s18 = scalar_select 0, %s17, %s15
  $region1: #{tpu_custom_call.1} parent=0
    #allocation2 [shape = 'u8[8192]{0}', space=vmem, size = 0x2000, scoped, tag = 'input window, operand 0, single buffered']
    #allocation3 [shape = 's32[1]{0}', space=sflag, size = 0x4, scoped, tag = 'scoped memory for tpu_custom_call.1']
    #allocation4 [shape = 's32[1]{0}', space=sflag, size = 0x4, scoped, tag = 'scoped memory for tpu_custom_call.1']
    #allocation5 [shape = 'u8[8192]{0}', space=vmem, size = 0x2000, scoped, tag = 'input window, operand 1, single buffered']
    #allocation6 [shape = 's32[1]{0}', space=sflag, size = 0x4, scoped, tag = 'scoped memory for tpu_custom_call.1']
    #allocation7 [shape = 'u8[8192]{0}', space=vmem, size = 0x2000, scoped, tag = 'input window, operand 2, single buffered']
    #allocation8 [shape = 'u8[8192]{0}', space=vmem, size = 0x2000, scoped, tag = 'input window, operand 3, single buffered']
    #allocation9 [shape = 's32[1]{0}', space=sflag, size = 0x4, scoped, tag = 'scoped memory for tpu_custom_call.1']
    #allocation10 [shape = 'u8[8192]{0}', space=vmem, size = 0x2000, scoped, tag = 'input window, operand 4, single buffered']
    #allocation11 [shape = 'u8[8192]{0}', space=vmem, size = 0x2000, scoped, tag = 'input window, operand 6, single buffered']
    #allocation12 [shape = 's32[1]{0}', space=sflag, size = 0x4, scoped, tag = 'scoped memory for tpu_custom_call.1']
    #allocation13 [shape = 'u8[8192]{0}', space=vmem, size = 0x2000, scoped, tag = 'input window, operand 8, single buffered']
    #allocation14 [shape = 'u8[8192]{0}', space=vmem, size = 0x2000, scoped, tag = 'output window, operand 0, single buffered']
    %19 = vsyncpa [#allocation3], 0
    %20 = vsyncpa [#allocation6], 0
    %21 = vsyncpa [#allocation9], 0
    %22 = vsyncpa [#allocation12], 0
    %23 = vsyncpa [#allocation4], 0
    // Predicated region
    $region2: #{tpu_custom_call.1} parent=1 // pred_check
      _
    $region3: #{tpu_custom_call.1} parent=1 // pred_check_branch
      %25 = sbr.rel (0) target = $region5
    $region4: #{tpu_custom_call.1} parent=1 // pred_region
      %s27 = ssub.s32 256, 256
      %28 = vsyncadd [#allocation3], %s27
      %s29 = sshll.u32 [#allocation2], 4
      %s30 = int_to_ptr.vmem [resolvable:$true] %s29
      %35 = dma.hbm_to_vmem [thread:$0]  %s0, 256, %s30, [#allocation3], 128, 128, 8
    $region5: #{tpu_custom_call.1} parent=1 // pred_fallthru
      _
    // Predicated region
    $region6: #{tpu_custom_call.1} parent=1 // pred_check
      _
    $region7: #{tpu_custom_call.1} parent=1 // pred_check_branch
      %37 = sbr.rel (0) target = $region9
    $region8: #{tpu_custom_call.1} parent=1 // pred_region
      %s39 = ssub.s32 256, 256
      %40 = vsyncadd [#allocation6], %s39
      %s41 = sshll.u32 [#allocation5], 4
      %s42 = int_to_ptr.vmem [resolvable:$true] %s41
      %47 = dma.hbm_to_vmem [thread:$0]  %s1, 256, %s42, [#allocation6], 128, 128, 8
    $region9: #{tpu_custom_call.1} parent=1 // pred_fallthru
      _
    // Predicated region
    $region10: #{tpu_custom_call.1} parent=1 // pred_check
      _
    $region11: #{tpu_custom_call.1} parent=1 // pred_check_branch
      %49 = sbr.rel (0) target = $region13
    $region12: #{tpu_custom_call.1} parent=1 // pred_region
      %s51 = ssub.s32 256, 256
      %52 = vsyncadd [#allocation6], %s51
      %s53 = sshll.u32 [#allocation7], 4
      %s54 = int_to_ptr.vmem [resolvable:$true] %s53
      %59 = dma.hbm_to_vmem [thread:$0]  %s2, 256, %s54, [#allocation6], 128, 128, 8
    $region13: #{tpu_custom_call.1} parent=1 // pred_fallthru
      _
    // Predicated region
    $region14: #{tpu_custom_call.1} parent=1 // pred_check
      _
    $region15: #{tpu_custom_call.1} parent=1 // pred_check_branch
      %61 = sbr.rel (0) target = $region17
    $region16: #{tpu_custom_call.1} parent=1 // pred_region
      %s63 = ssub.s32 256, 256
      %64 = vsyncadd [#allocation9], %s63
      %s65 = sshll.u32 [#allocation8], 4
      %s66 = int_to_ptr.vmem [resolvable:$true] %s65
      %71 = dma.hbm_to_vmem [thread:$0]  %s3, 256, %s66, [#allocation9], 128, 128, 8
    $region17: #{tpu_custom_call.1} parent=1 // pred_fallthru
      _
    // Predicated region
    $region18: #{tpu_custom_call.1} parent=1 // pred_check
      _
    $region19: #{tpu_custom_call.1} parent=1 // pred_check_branch
      %73 = sbr.rel (0) target = $region21
    $region20: #{tpu_custom_call.1} parent=1 // pred_region
      %s75 = ssub.s32 256, 256
      %76 = vsyncadd [#allocation9], %s75
      %s77 = sshll.u32 [#allocation10], 4
      %s78 = int_to_ptr.vmem [resolvable:$true] %s77
      %83 = dma.hbm_to_vmem [thread:$0]  %s4, 256, %s78, [#allocation9], 128, 128, 8
    $region21: #{tpu_custom_call.1} parent=1 // pred_fallthru
      _
    // Predicated region
    $region22: #{tpu_custom_call.1} parent=1 // pred_check
      _
    $region23: #{tpu_custom_call.1} parent=1 // pred_check_branch
      %85 = sbr.rel (0) target = $region25
    $region24: #{tpu_custom_call.1} parent=1 // pred_region
      _
    $region25: #{tpu_custom_call.1} parent=1 // pred_fallthru
      _
    // Predicated region
    $region26: #{tpu_custom_call.1} parent=1 // pred_check
      _
    $region27: #{tpu_custom_call.1} parent=1 // pred_check_branch
      %87 = sbr.rel (0) target = $region29
    $region28: #{tpu_custom_call.1} parent=1 // pred_region
      %s89 = ssub.s32 256, 256
      %90 = vsyncadd [#allocation12], %s89
      %s91 = sshll.u32 [#allocation11], 4
      %s92 = int_to_ptr.vmem [resolvable:$true] %s91
      %97 = dma.hbm_to_vmem [thread:$0]  %s6, 256, %s92, [#allocation12], 128, 128, 8
    $region29: #{tpu_custom_call.1} parent=1 // pred_fallthru
      _
    // Predicated region
    $region30: #{tpu_custom_call.1} parent=1 // pred_check
      _
    $region31: #{tpu_custom_call.1} parent=1 // pred_check_branch
      %99 = sbr.rel (0) target = $region33
    $region32: #{tpu_custom_call.1} parent=1 // pred_region
      _
    $region33: #{tpu_custom_call.1} parent=1 // pred_fallthru
      _
    // Predicated region
    $region34: #{tpu_custom_call.1} parent=1 // pred_check
      _
    $region35: #{tpu_custom_call.1} parent=1 // pred_check_branch
      %101 = sbr.rel (0) target = $region37
    $region36: #{tpu_custom_call.1} parent=1 // pred_region
      %s103 = ssub.s32 256, 256
      %104 = vsyncadd [#allocation12], %s103
      %s105 = sshll.u32 [#allocation13], 4
      %s106 = int_to_ptr.vmem [resolvable:$true] %s105
      %111 = dma.hbm_to_vmem [thread:$0]  %s8, 256, %s106, [#allocation12], 128, 128, 8
    $region37: #{tpu_custom_call.1} parent=1 // pred_fallthru
      _
    // Predicated region
    $region38: #{tpu_custom_call.1} parent=1 // pred_check
      _
    $region39: #{tpu_custom_call.1} parent=1 // pred_check_branch
      %113 = sbr.rel (0) target = $region41
    $region40: #{tpu_custom_call.1} parent=1 // pred_region
      _
    $region41: #{tpu_custom_call.1} parent=1 // pred_fallthru
      _
    // Predicated region
    $region42: #{tpu_custom_call.1} parent=1 // pred_check
      _
    $region43: #{tpu_custom_call.1} parent=1 // pred_check_branch
      %115 = sbr.rel (0) target = $region45
    $region44: #{tpu_custom_call.1} parent=1 // pred_region
      _
    $region45: #{tpu_custom_call.1} parent=1 // pred_fallthru
      _
    // Predicated region
    $region46: #{tpu_custom_call.1} parent=1 // pred_check
      _
    $region47: #{tpu_custom_call.1} parent=1 // pred_check_branch
      %117 = sbr.rel (0) target = $region49
    $region48: #{tpu_custom_call.1} parent=1 // pred_region
      _
    $region49: #{tpu_custom_call.1} parent=1 // pred_fallthru
      _
    // Predicated region
    $region50: #{tpu_custom_call.1} parent=1 // pred_check
      _
    $region51: #{tpu_custom_call.1} parent=1 // pred_check_branch
      %119 = sbr.rel (0) target = $region53
    $region52: #{tpu_custom_call.1} parent=1 // pred_region
      %120 = dma.done [#allocation3], 256
    $region53: #{tpu_custom_call.1} parent=1 // pred_fallthru
      _
    // Predicated region
    $region54: #{tpu_custom_call.1} parent=1 // pred_check
      _
    $region55: #{tpu_custom_call.1} parent=1 // pred_check_branch
      %122 = sbr.rel (0) target = $region57
    $region56: #{tpu_custom_call.1} parent=1 // pred_region
      %123 = dma.done [#allocation6], 256
    $region57: #{tpu_custom_call.1} parent=1 // pred_fallthru
      _
    // Predicated region
    $region58: #{tpu_custom_call.1} parent=1 // pred_check
      _
    $region59: #{tpu_custom_call.1} parent=1 // pred_check_branch
      %125 = sbr.rel (0) target = $region61
    $region60: #{tpu_custom_call.1} parent=1 // pred_region
      %126 = dma.done [#allocation6], 256
    $region61: #{tpu_custom_call.1} parent=1 // pred_fallthru
      _
    // Predicated region
    $region62: #{tpu_custom_call.1} parent=1 // pred_check
      _
    $region63: #{tpu_custom_call.1} parent=1 // pred_check_branch
      %128 = sbr.rel (0) target = $region65
    $region64: #{tpu_custom_call.1} parent=1 // pred_region
      %129 = dma.done [#allocation9], 256
    $region65: #{tpu_custom_call.1} parent=1 // pred_fallthru
      _
    // Predicated region
    $region66: #{tpu_custom_call.1} parent=1 // pred_check
      _
    $region67: #{tpu_custom_call.1} parent=1 // pred_check_branch
      %131 = sbr.rel (0) target = $region69
    $region68: #{tpu_custom_call.1} parent=1 // pred_region
      %132 = dma.done [#allocation9], 256
    $region69: #{tpu_custom_call.1} parent=1 // pred_fallthru
      _
    // Predicated region
    $region70: #{tpu_custom_call.1} parent=1 // pred_check
      _
    $region71: #{tpu_custom_call.1} parent=1 // pred_check_branch
      %134 = sbr.rel (0) target = $region73
    $region72: #{tpu_custom_call.1} parent=1 // pred_region
      %135 = dma.done [#allocation12], 256
    $region73: #{tpu_custom_call.1} parent=1 // pred_fallthru
      _
    // Predicated region
    $region74: #{tpu_custom_call.1} parent=1 // pred_check
      _
    $region75: #{tpu_custom_call.1} parent=1 // pred_check_branch
      %137 = sbr.rel (0) target = $region77
    $region76: #{tpu_custom_call.1} parent=1 // pred_region
      %138 = dma.done [#allocation12], 256
    $region77: #{tpu_custom_call.1} parent=1 // pred_fallthru
      _
    %v139 = vld [vmem:[#allocation2] sm:$0xff]
    %v140 = vld [vmem:[#allocation2 + $0x8] sm:$0xff]
    %v141 = vld [vmem:[#allocation10] sm:$0xff]
    %v142 = vld [vmem:[#allocation10 + $0x8] sm:$0xff]
    %v143 = vld [vmem:[%s5] sm:$0x1]
    %v145 = vlaneseq
    %v146 = vshrl.u32 %v145, 7
    %v147 = vsub.s32 0, %v146
    %v148 = vrot.slane %v143, %v147
    %vm150 = vcmask 130048
    %v152 = vsel %vm150, %v139, 0
    %v155 = vsel %vm150, %v140, 0
    %157 = vmatprep.subr.mxu0 0.0
    %158 = vmatpush1.msra.mxu0 %v141
    %159 = vmatprep.subr.mxu0 0.0
    %160 = vmatpush1.msra.mxu0 %v142
    %161 = vmatprep.subr.mxu0 0.0
    %162 = vmatpush1.msra.mxu0 0.0
    %163 = vmatprep.subr.mxu0 0.0
    %164 = vmatpush1.msra.mxu0 0.0
    %165 = vmatprep.subr.mxu0 0.0
    %166 = vmatpush1.msra.mxu0 0.0
    %167 = vmatprep.subr.mxu0 0.0
    %168 = vmatpush1.msra.mxu0 0.0
    %169 = vmatprep.subr.mxu0 0.0
    %170 = vmatpush1.msra.mxu0 0.0
    %171 = vmatprep.subr.mxu0 0.0
    %172 = vmatpush1.msra.mxu0 0.0
    %173 = vmatprep.subr.mxu0 0.0
    %174 = vmatpush1.msra.mxu0 0.0
    %175 = vmatprep.subr.mxu0 0.0
    %176 = vmatpush1.msra.mxu0 0.0
    %177 = vmatprep.subr.mxu0 0.0
    %178 = vmatpush1.msra.mxu0 0.0
    %179 = vmatprep.subr.mxu0 0.0
    %180 = vmatpush1.msra.mxu0 0.0
    %181 = vmatprep.subr.mxu0 0.0
    %182 = vmatpush1.msra.mxu0 0.0
    %183 = vmatprep.subr.mxu0 0.0
    %184 = vmatpush1.msra.mxu0 0.0
    %185 = vmatprep.subr.mxu0 0.0
    %186 = vmatpush1.msra.mxu0 0.0
    %187 = vmatprep.subr.mxu0 0.0
    %188 = vmatpush1.msra.mxu0 0.0
    %189 = vmatprep.subr.mxu0 0.0
    %190 = vmatpush1.msra.mxu0 0.0
    %191 = vmatprep.subr.mxu0 0.0
    %192 = vmatpush1.msra.mxu0 0.0
    %193 = vmatprep.subr.mxu0 0.0
    %194 = vmatpush1.msra.mxu0 0.0
    %195 = vmatprep.subr.mxu0 0.0
    %196 = vmatpush1.msra.mxu0 0.0
    %197 = vmatprep.subr.mxu0 0.0
    %198 = vmatpush1.msra.mxu0 0.0
    %199 = vmatprep.subr.mxu0 0.0
    %200 = vmatpush1.msra.mxu0 0.0
    %201 = vmatprep.subr.mxu0 0.0
    %202 = vmatpush1.msra.mxu0 0.0
    %203 = vmatprep.subr.mxu0 0.0
    %204 = vmatpush1.msra.mxu0 0.0
    %205 = vmatprep.subr.mxu0 0.0
    %206 = vmatpush1.msra.mxu0 0.0
    %207 = vmatprep.subr.mxu0 0.0
    %208 = vmatpush1.msra.mxu0 0.0
    %209 = vmatprep.subr.mxu0 0.0
    %210 = vmatpush1.msra.mxu0 0.0
    %211 = vmatprep.subr.mxu0 0.0
    %212 = vmatpush1.msra.mxu0 0.0
    %213 = vmatprep.subr.mxu0 0.0
    %214 = vmatpush1.msra.mxu0 0.0
    %215 = vmatprep.subr.mxu0 0.0
    %216 = vmatpush1.msra.mxu0 0.0
    %217 = vmatprep.subr.mxu0 0.0
    %218 = vmatpush1.msra.mxu0 0.0
    %219 = vmatprep.subr.mxu0 0.0
    %220 = vmatpush1.msra.mxu0 0.0
    %221 = vmatprep.mubr.f32.mxu0 0.0
    %222 = vmatmul.mubr.f32.gmra.mrb[0].mxu0 %v152
    %v223 = vpop.f32.mrb[0].mxu0
    %v224 = vadd.f32 %v148, %v223
    %v225 = vpop.f32.mrb[0].mxu0
    %226 = vmatprep.mubr.f32.mxu0 0.0
    %227 = vmatmul.mubr.f32.gmra.mrb[0].mxu0 %v155
    %v228 = vpop.f32.mrb[0].mxu0
    %v229 = vadd.f32 %v148, %v228
    %v230 = vpop.f32.mrb[0].mxu0
    %231 = vdwg.mxu0
    %v232 = vld [vmem:[#allocation5] sm:$0xff]
    %v233 = vld [vmem:[#allocation5 + $0x8] sm:$0xff]
    %v234 = vld [vmem:[#allocation11] sm:$0xff]
    %v235 = vld [vmem:[#allocation11 + $0x8] sm:$0xff]
    %v236 = vld [vmem:[%s7] sm:$0x1]
    %v238 = vlaneseq
    %v239 = vshrl.u32 %v238, 7
    %v240 = vsub.s32 0, %v239
    %v241 = vrot.slane %v236, %v240
    %v244 = vsel %vm150, %v232, 0
    %v247 = vsel %vm150, %v233, 0
    %249 = vmatprep.subr.mxu0 0.0
    %250 = vmatpush1.msra.mxu0 %v234
    %251 = vmatprep.subr.mxu0 0.0
    %252 = vmatpush1.msra.mxu0 %v235
    %253 = vmatprep.subr.mxu0 0.0
    %254 = vmatpush1.msra.mxu0 0.0
    %255 = vmatprep.subr.mxu0 0.0
    %256 = vmatpush1.msra.mxu0 0.0
    %257 = vmatprep.subr.mxu0 0.0
    %258 = vmatpush1.msra.mxu0 0.0
    %259 = vmatprep.subr.mxu0 0.0
    %260 = vmatpush1.msra.mxu0 0.0
    %261 = vmatprep.subr.mxu0 0.0
    %262 = vmatpush1.msra.mxu0 0.0
    %263 = vmatprep.subr.mxu0 0.0
    %264 = vmatpush1.msra.mxu0 0.0
    %265 = vmatprep.subr.mxu0 0.0
    %266 = vmatpush1.msra.mxu0 0.0
    %267 = vmatprep.subr.mxu0 0.0
    %268 = vmatpush1.msra.mxu0 0.0
    %269 = vmatprep.subr.mxu0 0.0
    %270 = vmatpush1.msra.mxu0 0.0
    %271 = vmatprep.subr.mxu0 0.0
    %272 = vmatpush1.msra.mxu0 0.0
    %273 = vmatprep.subr.mxu0 0.0
    %274 = vmatpush1.msra.mxu0 0.0
    %275 = vmatprep.subr.mxu0 0.0
    %276 = vmatpush1.msra.mxu0 0.0
    %277 = vmatprep.subr.mxu0 0.0
    %278 = vmatpush1.msra.mxu0 0.0
    %279 = vmatprep.subr.mxu0 0.0
    %280 = vmatpush1.msra.mxu0 0.0
    %281 = vmatprep.subr.mxu0 0.0
    %282 = vmatpush1.msra.mxu0 0.0
    %283 = vmatprep.subr.mxu0 0.0
    %284 = vmatpush1.msra.mxu0 0.0
    %285 = vmatprep.subr.mxu0 0.0
    %286 = vmatpush1.msra.mxu0 0.0
    %287 = vmatprep.subr.mxu0 0.0
    %288 = vmatpush1.msra.mxu0 0.0
    %289 = vmatprep.subr.mxu0 0.0
    %290 = vmatpush1.msra.mxu0 0.0
    %291 = vmatprep.subr.mxu0 0.0
    %292 = vmatpush1.msra.mxu0 0.0
    %293 = vmatprep.subr.mxu0 0.0
    %294 = vmatpush1.msra.mxu0 0.0
    %295 = vmatprep.subr.mxu0 0.0
    %296 = vmatpush1.msra.mxu0 0.0
    %297 = vmatprep.subr.mxu0 0.0
    %298 = vmatpush1.msra.mxu0 0.0
    %299 = vmatprep.subr.mxu0 0.0
    %300 = vmatpush1.msra.mxu0 0.0
    %301 = vmatprep.subr.mxu0 0.0
    %302 = vmatpush1.msra.mxu0 0.0
    %303 = vmatprep.subr.mxu0 0.0
    %304 = vmatpush1.msra.mxu0 0.0
    %305 = vmatprep.subr.mxu0 0.0
    %306 = vmatpush1.msra.mxu0 0.0
    %307 = vmatprep.subr.mxu0 0.0
    %308 = vmatpush1.msra.mxu0 0.0
    %309 = vmatprep.subr.mxu0 0.0
    %310 = vmatpush1.msra.mxu0 0.0
    %311 = vmatprep.subr.mxu0 0.0
    %312 = vmatpush1.msra.mxu0 0.0
    %313 = vmatprep.mubr.f32.mxu0 0.0
    %314 = vmatmul.mubr.f32.gmra.mrb[0].mxu0 %v244
    %v315 = vpop.f32.mrb[0].mxu0
    %v316 = vadd.f32 %v241, %v315
    %v317 = vpop.f32.mrb[0].mxu0
    %318 = vmatprep.mubr.f32.mxu0 0.0
    %319 = vmatmul.mubr.f32.gmra.mrb[0].mxu0 %v247
    %v320 = vpop.f32.mrb[0].mxu0
    %v321 = vadd.f32 %v241, %v320
    %v322 = vpop.f32.mrb[0].mxu0
    %323 = vdwg.mxu0
    %v324 = vld [vmem:[#allocation7] sm:$0xff]
    %v325 = vld [vmem:[#allocation7 + $0x8] sm:$0xff]
    %v326 = vld [vmem:[#allocation13] sm:$0xff]
    %v327 = vld [vmem:[#allocation13 + $0x8] sm:$0xff]
    %v328 = vld [vmem:[%s9] sm:$0x1]
    %v330 = vlaneseq
    %v331 = vshrl.u32 %v330, 7
    %v332 = vsub.s32 0, %v331
    %v333 = vrot.slane %v328, %v332
    %v336 = vsel %vm150, %v324, 0
    %v339 = vsel %vm150, %v325, 0
    %341 = vmatprep.subr.mxu0 0.0
    %342 = vmatpush1.msra.mxu0 %v326
    %343 = vmatprep.subr.mxu0 0.0
    %344 = vmatpush1.msra.mxu0 %v327
    %345 = vmatprep.subr.mxu0 0.0
    %346 = vmatpush1.msra.mxu0 0.0
    %347 = vmatprep.subr.mxu0 0.0
    %348 = vmatpush1.msra.mxu0 0.0
    %349 = vmatprep.subr.mxu0 0.0
    %350 = vmatpush1.msra.mxu0 0.0
    %351 = vmatprep.subr.mxu0 0.0
    %352 = vmatpush1.msra.mxu0 0.0
    %353 = vmatprep.subr.mxu0 0.0
    %354 = vmatpush1.msra.mxu0 0.0
    %355 = vmatprep.subr.mxu0 0.0
    %356 = vmatpush1.msra.mxu0 0.0
    %357 = vmatprep.subr.mxu0 0.0
    %358 = vmatpush1.msra.mxu0 0.0
    %359 = vmatprep.subr.mxu0 0.0
    %360 = vmatpush1.msra.mxu0 0.0
    %361 = vmatprep.subr.mxu0 0.0
    %362 = vmatpush1.msra.mxu0 0.0
    %363 = vmatprep.subr.mxu0 0.0
    %364 = vmatpush1.msra.mxu0 0.0
    %365 = vmatprep.subr.mxu0 0.0
    %366 = vmatpush1.msra.mxu0 0.0
    %367 = vmatprep.subr.mxu0 0.0
    %368 = vmatpush1.msra.mxu0 0.0
    %369 = vmatprep.subr.mxu0 0.0
    %370 = vmatpush1.msra.mxu0 0.0
    %371 = vmatprep.subr.mxu0 0.0
    %372 = vmatpush1.msra.mxu0 0.0
    %373 = vmatprep.subr.mxu0 0.0
    %374 = vmatpush1.msra.mxu0 0.0
    %375 = vmatprep.subr.mxu0 0.0
    %376 = vmatpush1.msra.mxu0 0.0
    %377 = vmatprep.subr.mxu0 0.0
    %378 = vmatpush1.msra.mxu0 0.0
    %379 = vmatprep.subr.mxu0 0.0
    %380 = vmatpush1.msra.mxu0 0.0
    %381 = vmatprep.subr.mxu0 0.0
    %382 = vmatpush1.msra.mxu0 0.0
    %383 = vmatprep.subr.mxu0 0.0
    %384 = vmatpush1.msra.mxu0 0.0
    %385 = vmatprep.subr.mxu0 0.0
    %386 = vmatpush1.msra.mxu0 0.0
    %387 = vmatprep.subr.mxu0 0.0
    %388 = vmatpush1.msra.mxu0 0.0
    %389 = vmatprep.subr.mxu0 0.0
    %390 = vmatpush1.msra.mxu0 0.0
    %391 = vmatprep.subr.mxu0 0.0
    %392 = vmatpush1.msra.mxu0 0.0
    %393 = vmatprep.subr.mxu0 0.0
    %394 = vmatpush1.msra.mxu0 0.0
    %395 = vmatprep.subr.mxu0 0.0
    %396 = vmatpush1.msra.mxu0 0.0
    %397 = vmatprep.subr.mxu0 0.0
    %398 = vmatpush1.msra.mxu0 0.0
    %399 = vmatprep.subr.mxu0 0.0
    %400 = vmatpush1.msra.mxu0 0.0
    %401 = vmatprep.subr.mxu0 0.0
    %402 = vmatpush1.msra.mxu0 0.0
    %403 = vmatprep.subr.mxu0 0.0
    %404 = vmatpush1.msra.mxu0 0.0
    %405 = vmatprep.mubr.f32.mxu0 0.0
    %406 = vmatmul.mubr.f32.gmra.mrb[0].mxu0 %v336
    %v407 = vpop.f32.mrb[0].mxu0
    %v408 = vadd.f32 %v333, %v407
    %v409 = vpop.f32.mrb[0].mxu0
    %410 = vmatprep.mubr.f32.mxu0 0.0
    %411 = vmatmul.mubr.f32.gmra.mrb[0].mxu0 %v339
    %v412 = vpop.f32.mrb[0].mxu0
    %v413 = vadd.f32 %v333, %v412
    %v414 = vpop.f32.mrb[0].mxu0
    %415 = vdwg.mxu0
    %v416 = vmul.f32 %v408, 0.35355338
    %v417 = vmul.f32 %v413, 0.35355338
    %v418 = vld [vmem:[%s10] sm:$0xff]
    %v419 = vld [vmem:[%s10 + $0x8] sm:$0xff]
    %v420 = vld [vmem:[%s10 + $0x10] sm:$0xff]
    %v421 = vld [vmem:[%s10 + $0x18] sm:$0xff]
    %v422 = vld [vmem:[%s11] sm:$0x1]
    %v423 = vld [vmem:[#allocation8] sm:$0xff]
    %vm424 = vcmp.eq.f32.partialorder %v423, 0.0
    %vm425 = vcmask 64512
    %v427 = vsel %vm425, %v416, 0
    %v430 = vsel %vm425, %v224, 0
    %432 = vmatprep.subr.mxu0 0.0
    %433 = vmatpush1.xpose.msra.mxu0 %v430
    %434 = vmatprep.subr.mxu0 0.0
    %435 = vmatpush1.xpose.msra.mxu0 0.0
    %436 = vmatprep.subr.mxu0 0.0
    %437 = vmatpush1.xpose.msra.mxu0 0.0
    %438 = vmatprep.subr.mxu0 0.0
    %439 = vmatpush1.xpose.msra.mxu0 0.0
    %440 = vmatprep.subr.mxu0 0.0
    %441 = vmatpush1.xpose.msra.mxu0 0.0
    %442 = vmatprep.subr.mxu0 0.0
    %443 = vmatpush1.xpose.msra.mxu0 0.0
    %444 = vmatprep.subr.mxu0 0.0
    %445 = vmatpush1.xpose.msra.mxu0 0.0
    %446 = vmatprep.subr.mxu0 0.0
    %447 = vmatpush1.xpose.msra.mxu0 0.0
    %448 = vmatprep.subr.mxu0 0.0
    %449 = vmatpush1.xpose.msra.mxu0 0.0
    %450 = vmatprep.subr.mxu0 0.0
    %451 = vmatpush1.xpose.msra.mxu0 0.0
    %452 = vmatprep.subr.mxu0 0.0
    %453 = vmatpush1.xpose.msra.mxu0 0.0
    %454 = vmatprep.subr.mxu0 0.0
    %455 = vmatpush1.xpose.msra.mxu0 0.0
    %456 = vmatprep.subr.mxu0 0.0
    %457 = vmatpush1.xpose.msra.mxu0 0.0
    %458 = vmatprep.subr.mxu0 0.0
    %459 = vmatpush1.xpose.msra.mxu0 0.0
    %460 = vmatprep.subr.mxu0 0.0
    %461 = vmatpush1.xpose.msra.mxu0 0.0
    %462 = vmatprep.subr.mxu0 0.0
    %463 = vmatpush1.xpose.msra.mxu0 0.0
    %464 = vmatprep.subr.mxu0 0.0
    %465 = vmatpush1.xpose.msra.mxu0 0.0
    %466 = vmatprep.subr.mxu0 0.0
    %467 = vmatpush1.xpose.msra.mxu0 0.0
    %468 = vmatprep.subr.mxu0 0.0
    %469 = vmatpush1.xpose.msra.mxu0 0.0
    %470 = vmatprep.subr.mxu0 0.0
    %471 = vmatpush1.xpose.msra.mxu0 0.0
    %472 = vmatprep.subr.mxu0 0.0
    %473 = vmatpush1.xpose.msra.mxu0 0.0
    %474 = vmatprep.subr.mxu0 0.0
    %475 = vmatpush1.xpose.msra.mxu0 0.0
    %476 = vmatprep.subr.mxu0 0.0
    %477 = vmatpush1.xpose.msra.mxu0 0.0
    %478 = vmatprep.subr.mxu0 0.0
    %479 = vmatpush1.xpose.msra.mxu0 0.0
    %480 = vmatprep.subr.mxu0 0.0
    %481 = vmatpush1.xpose.msra.mxu0 0.0
    %482 = vmatprep.subr.mxu0 0.0
    %483 = vmatpush1.xpose.msra.mxu0 0.0
    %484 = vmatprep.subr.mxu0 0.0
    %485 = vmatpush1.xpose.msra.mxu0 0.0
    %486 = vmatprep.subr.mxu0 0.0
    %487 = vmatpush1.xpose.msra.mxu0 0.0
    %488 = vmatprep.subr.mxu0 0.0
    %489 = vmatpush1.xpose.msra.mxu0 0.0
    %490 = vmatprep.subr.mxu0 0.0
    %491 = vmatpush1.xpose.msra.mxu0 0.0
    %492 = vmatprep.subr.mxu0 0.0
    %493 = vmatpush1.xpose.msra.mxu0 0.0
    %494 = vmatprep.subr.mxu0 0.0
    %495 = vmatpush1.xpose.msra.mxu0 0.0
    %496 = vmatprep.mubr.f32.mxu0 0.0
    %497 = vmatmul.mubr.f32.gmra.mrb[0].mxu0 %v427
    %v498 = vpop.f32.mrb[0].mxu0
    %v499 = vadd.f32 0.0, %v498
    %v500 = vpop.f32.mrb[0].mxu0
    %501 = vdwg.mxu0
    %v502 = vsel %vm424, -3.4028235e+38, %v499
    %v503 = vsel %vm425, %v502, -inf
    %504 = vmax.xlane.f32.xlu0 %v503
    %v505 = vpop.xlane.xlu0 %504
    %v506 = vsub.f32 %v502, %v505
    %v507 = vmul.f32 %v506, 1.442695
    %v508 = vpow.pop %v507
    %v509 = vsel %vm425, %v508, 0.0
    %510 = vadd.xlane.f32.xlu0 %v509
    %v511 = vpop.xlane.xlu0 %510
    %v512 = vrcp.pop %v511
    %v513 = vmul.f32 %v508, %v512
    %v515 = vsel %vm425, %v513, 0
    %517 = vmatprep.subr.mxu0 0.0
    %518 = vmatpush1.msra.mxu0 %v316
    %519 = vmatprep.subr.mxu0 0.0
    %520 = vmatpush1.msra.mxu0 0.0
    %521 = vmatprep.subr.mxu0 0.0
    %522 = vmatpush1.msra.mxu0 0.0
    %523 = vmatprep.subr.mxu0 0.0
    %524 = vmatpush1.msra.mxu0 0.0
    %525 = vmatprep.subr.mxu0 0.0
    %526 = vmatpush1.msra.mxu0 0.0
    %527 = vmatprep.subr.mxu0 0.0
    %528 = vmatpush1.msra.mxu0 0.0
    %529 = vmatprep.subr.mxu0 0.0
    %530 = vmatpush1.msra.mxu0 0.0
    %531 = vmatprep.subr.mxu0 0.0
    %532 = vmatpush1.msra.mxu0 0.0
    %533 = vmatprep.subr.mxu0 0.0
    %534 = vmatpush1.msra.mxu0 0.0
    %535 = vmatprep.subr.mxu0 0.0
    %536 = vmatpush1.msra.mxu0 0.0
    %537 = vmatprep.subr.mxu0 0.0
    %538 = vmatpush1.msra.mxu0 0.0
    %539 = vmatprep.subr.mxu0 0.0
    %540 = vmatpush1.msra.mxu0 0.0
    %541 = vmatprep.subr.mxu0 0.0
    %542 = vmatpush1.msra.mxu0 0.0
    %543 = vmatprep.subr.mxu0 0.0
    %544 = vmatpush1.msra.mxu0 0.0
    %545 = vmatprep.subr.mxu0 0.0
    %546 = vmatpush1.msra.mxu0 0.0
    %547 = vmatprep.subr.mxu0 0.0
    %548 = vmatpush1.msra.mxu0 0.0
    %549 = vmatprep.subr.mxu0 0.0
    %550 = vmatpush1.msra.mxu0 0.0
    %551 = vmatprep.subr.mxu0 0.0
    %552 = vmatpush1.msra.mxu0 0.0
    %553 = vmatprep.subr.mxu0 0.0
    %554 = vmatpush1.msra.mxu0 0.0
    %555 = vmatprep.subr.mxu0 0.0
    %556 = vmatpush1.msra.mxu0 0.0
    %557 = vmatprep.subr.mxu0 0.0
    %558 = vmatpush1.msra.mxu0 0.0
    %559 = vmatprep.subr.mxu0 0.0
    %560 = vmatpush1.msra.mxu0 0.0
    %561 = vmatprep.subr.mxu0 0.0
    %562 = vmatpush1.msra.mxu0 0.0
    %563 = vmatprep.subr.mxu0 0.0
    %564 = vmatpush1.msra.mxu0 0.0
    %565 = vmatprep.subr.mxu0 0.0
    %566 = vmatpush1.msra.mxu0 0.0
    %567 = vmatprep.subr.mxu0 0.0
    %568 = vmatpush1.msra.mxu0 0.0
    %569 = vmatprep.subr.mxu0 0.0
    %570 = vmatpush1.msra.mxu0 0.0
    %571 = vmatprep.subr.mxu0 0.0
    %572 = vmatpush1.msra.mxu0 0.0
    %573 = vmatprep.subr.mxu0 0.0
    %574 = vmatpush1.msra.mxu0 0.0
    %575 = vmatprep.subr.mxu0 0.0
    %576 = vmatpush1.msra.mxu0 0.0
    %577 = vmatprep.subr.mxu0 0.0
    %578 = vmatpush1.msra.mxu0 0.0
    %579 = vmatprep.subr.mxu0 0.0
    %580 = vmatpush1.msra.mxu0 0.0
    %581 = vmatprep.mubr.f32.mxu0 0.0
    %582 = vmatmul.mubr.f32.gmra.mrb[0].mxu0 %v515
    %v583 = vpop.f32.mrb[0].mxu0
    %v584 = vadd.f32 0.0, %v583
    %v585 = vpop.f32.mrb[0].mxu0
    %586 = vdwg.mxu0
    %587 = vrot.lane.b32.xlu0 %v416, 120
    %v588 = vpop.permute.xlu0 %587
    %589 = vrot.lane.b32.xlu0 %v224, 120
    %v590 = vpop.permute.xlu0 %589
    %v591 = vsel %vm425, %v588, 0
    %v593 = vsel %vm425, %v590, 0
    %595 = vmatprep.subr.mxu0 0.0
    %596 = vmatpush1.xpose.msra.mxu0 %v593
    %597 = vmatprep.subr.mxu0 0.0
    %598 = vmatpush1.xpose.msra.mxu0 0.0
    %599 = vmatprep.subr.mxu0 0.0
    %600 = vmatpush1.xpose.msra.mxu0 0.0
    %601 = vmatprep.subr.mxu0 0.0
    %602 = vmatpush1.xpose.msra.mxu0 0.0
    %603 = vmatprep.subr.mxu0 0.0
    %604 = vmatpush1.xpose.msra.mxu0 0.0
    %605 = vmatprep.subr.mxu0 0.0
    %606 = vmatpush1.xpose.msra.mxu0 0.0
    %607 = vmatprep.subr.mxu0 0.0
    %608 = vmatpush1.xpose.msra.mxu0 0.0
    %609 = vmatprep.subr.mxu0 0.0
    %610 = vmatpush1.xpose.msra.mxu0 0.0
    %611 = vmatprep.subr.mxu0 0.0
    %612 = vmatpush1.xpose.msra.mxu0 0.0
    %613 = vmatprep.subr.mxu0 0.0
    %614 = vmatpush1.xpose.msra.mxu0 0.0
    %615 = vmatprep.subr.mxu0 0.0
    %616 = vmatpush1.xpose.msra.mxu0 0.0
    %617 = vmatprep.subr.mxu0 0.0
    %618 = vmatpush1.xpose.msra.mxu0 0.0
    %619 = vmatprep.subr.mxu0 0.0
    %620 = vmatpush1.xpose.msra.mxu0 0.0
    %621 = vmatprep.subr.mxu0 0.0
    %622 = vmatpush1.xpose.msra.mxu0 0.0
    %623 = vmatprep.subr.mxu0 0.0
    %624 = vmatpush1.xpose.msra.mxu0 0.0
    %625 = vmatprep.subr.mxu0 0.0
    %626 = vmatpush1.xpose.msra.mxu0 0.0
    %627 = vmatprep.subr.mxu0 0.0
    %628 = vmatpush1.xpose.msra.mxu0 0.0
    %629 = vmatprep.subr.mxu0 0.0
    %630 = vmatpush1.xpose.msra.mxu0 0.0
    %631 = vmatprep.subr.mxu0 0.0
    %632 = vmatpush1.xpose.msra.mxu0 0.0
    %633 = vmatprep.subr.mxu0 0.0
    %634 = vmatpush1.xpose.msra.mxu0 0.0
    %635 = vmatprep.subr.mxu0 0.0
    %636 = vmatpush1.xpose.msra.mxu0 0.0
    %637 = vmatprep.subr.mxu0 0.0
    %638 = vmatpush1.xpose.msra.mxu0 0.0
    %639 = vmatprep.subr.mxu0 0.0
    %640 = vmatpush1.xpose.msra.mxu0 0.0
    %641 = vmatprep.subr.mxu0 0.0
    %642 = vmatpush1.xpose.msra.mxu0 0.0
    %643 = vmatprep.subr.mxu0 0.0
    %644 = vmatpush1.xpose.msra.mxu0 0.0
    %645 = vmatprep.subr.mxu0 0.0
    %646 = vmatpush1.xpose.msra.mxu0 0.0
    %647 = vmatprep.subr.mxu0 0.0
    %648 = vmatpush1.xpose.msra.mxu0 0.0
    %649 = vmatprep.subr.mxu0 0.0
    %650 = vmatpush1.xpose.msra.mxu0 0.0
    %651 = vmatprep.subr.mxu0 0.0
    %652 = vmatpush1.xpose.msra.mxu0 0.0
    %653 = vmatprep.subr.mxu0 0.0
    %654 = vmatpush1.xpose.msra.mxu0 0.0
    %655 = vmatprep.subr.mxu0 0.0
    %656 = vmatpush1.xpose.msra.mxu0 0.0
    %657 = vmatprep.subr.mxu0 0.0
    %658 = vmatpush1.xpose.msra.mxu0 0.0
    %659 = vmatprep.mubr.f32.mxu0 0.0
    %660 = vmatmul.mubr.f32.gmra.mrb[0].mxu0 %v591
    %v661 = vpop.f32.mrb[0].mxu0
    %v662 = vadd.f32 0.0, %v661
    %v663 = vpop.f32.mrb[0].mxu0
    %664 = vdwg.mxu0
    %v665 = vsel %vm424, -3.4028235e+38, %v662
    %v666 = vsel %vm425, %v665, -inf
    %667 = vmax.xlane.f32.xlu0 %v666
    %v668 = vpop.xlane.xlu0 %667
    %v669 = vsub.f32 %v665, %v668
    %v670 = vmul.f32 %v669, 1.442695
    %v671 = vpow.pop %v670
    %v672 = vsel %vm425, %v671, 0.0
    %673 = vadd.xlane.f32.xlu0 %v672
    %v674 = vpop.xlane.xlu0 %673
    %v675 = vrcp.pop %v674
    %v676 = vmul.f32 %v671, %v675
    %678 = vrot.lane.b32.xlu0 %v316, 120
    %v679 = vpop.permute.xlu0 %678
    %v682 = vsel %vm425, %v676, 0
    %684 = vmatprep.subr.mxu0 0.0
    %685 = vmatpush1.msra.mxu0 %v679
    %686 = vmatprep.subr.mxu0 0.0
    %687 = vmatpush1.msra.mxu0 0.0
    %688 = vmatprep.subr.mxu0 0.0
    %689 = vmatpush1.msra.mxu0 0.0
    %690 = vmatprep.subr.mxu0 0.0
    %691 = vmatpush1.msra.mxu0 0.0
    %692 = vmatprep.subr.mxu0 0.0
    %693 = vmatpush1.msra.mxu0 0.0
    %694 = vmatprep.subr.mxu0 0.0
    %695 = vmatpush1.msra.mxu0 0.0
    %696 = vmatprep.subr.mxu0 0.0
    %697 = vmatpush1.msra.mxu0 0.0
    %698 = vmatprep.subr.mxu0 0.0
    %699 = vmatpush1.msra.mxu0 0.0
    %700 = vmatprep.subr.mxu0 0.0
    %701 = vmatpush1.msra.mxu0 0.0
    %702 = vmatprep.subr.mxu0 0.0
    %703 = vmatpush1.msra.mxu0 0.0
    %704 = vmatprep.subr.mxu0 0.0
    %705 = vmatpush1.msra.mxu0 0.0
    %706 = vmatprep.subr.mxu0 0.0
    %707 = vmatpush1.msra.mxu0 0.0
    %708 = vmatprep.subr.mxu0 0.0
    %709 = vmatpush1.msra.mxu0 0.0
    %710 = vmatprep.subr.mxu0 0.0
    %711 = vmatpush1.msra.mxu0 0.0
    %712 = vmatprep.subr.mxu0 0.0
    %713 = vmatpush1.msra.mxu0 0.0
    %714 = vmatprep.subr.mxu0 0.0
    %715 = vmatpush1.msra.mxu0 0.0
    %716 = vmatprep.subr.mxu0 0.0
    %717 = vmatpush1.msra.mxu0 0.0
    %718 = vmatprep.subr.mxu0 0.0
    %719 = vmatpush1.msra.mxu0 0.0
    %720 = vmatprep.subr.mxu0 0.0
    %721 = vmatpush1.msra.mxu0 0.0
    %722 = vmatprep.subr.mxu0 0.0
    %723 = vmatpush1.msra.mxu0 0.0
    %724 = vmatprep.subr.mxu0 0.0
    %725 = vmatpush1.msra.mxu0 0.0
    %726 = vmatprep.subr.mxu0 0.0
    %727 = vmatpush1.msra.mxu0 0.0
    %728 = vmatprep.subr.mxu0 0.0
    %729 = vmatpush1.msra.mxu0 0.0
    %730 = vmatprep.subr.mxu0 0.0
    %731 = vmatpush1.msra.mxu0 0.0
    %732 = vmatprep.subr.mxu0 0.0
    %733 = vmatpush1.msra.mxu0 0.0
    %734 = vmatprep.subr.mxu0 0.0
    %735 = vmatpush1.msra.mxu0 0.0
    %736 = vmatprep.subr.mxu0 0.0
    %737 = vmatpush1.msra.mxu0 0.0
    %738 = vmatprep.subr.mxu0 0.0
    %739 = vmatpush1.msra.mxu0 0.0
    %740 = vmatprep.subr.mxu0 0.0
    %741 = vmatpush1.msra.mxu0 0.0
    %742 = vmatprep.subr.mxu0 0.0
    %743 = vmatpush1.msra.mxu0 0.0
    %744 = vmatprep.subr.mxu0 0.0
    %745 = vmatpush1.msra.mxu0 0.0
    %746 = vmatprep.subr.mxu0 0.0
    %747 = vmatpush1.msra.mxu0 0.0
    %748 = vmatprep.mubr.f32.mxu0 0.0
    %749 = vmatmul.mubr.f32.gmra.mrb[0].mxu0 %v682
    %v750 = vpop.f32.mrb[0].mxu0
    %v751 = vadd.f32 0.0, %v750
    %v752 = vpop.f32.mrb[0].mxu0
    %753 = vdwg.mxu0
    %v755 = vsel %vm425, %v751, 0
    %757 = vmatprep.subr.mxu0 0.0
    %758 = vmatpush1.msra.mxu0 %v419
    %759 = vmatprep.subr.mxu0 0.0
    %760 = vmatpush1.msra.mxu0 0.0
    %761 = vmatprep.subr.mxu0 0.0
    %762 = vmatpush1.msra.mxu0 0.0
    %763 = vmatprep.subr.mxu0 0.0
    %764 = vmatpush1.msra.mxu0 0.0
    %765 = vmatprep.subr.mxu0 0.0
    %766 = vmatpush1.msra.mxu0 0.0
    %767 = vmatprep.subr.mxu0 0.0
    %768 = vmatpush1.msra.mxu0 0.0
    %769 = vmatprep.subr.mxu0 0.0
    %770 = vmatpush1.msra.mxu0 0.0
    %771 = vmatprep.subr.mxu0 0.0
    %772 = vmatpush1.msra.mxu0 0.0
    %773 = vmatprep.subr.mxu0 0.0
    %774 = vmatpush1.msra.mxu0 0.0
    %775 = vmatprep.subr.mxu0 0.0
    %776 = vmatpush1.msra.mxu0 0.0
    %777 = vmatprep.subr.mxu0 0.0
    %778 = vmatpush1.msra.mxu0 0.0
    %779 = vmatprep.subr.mxu0 0.0
    %780 = vmatpush1.msra.mxu0 0.0
    %781 = vmatprep.subr.mxu0 0.0
    %782 = vmatpush1.msra.mxu0 0.0
    %783 = vmatprep.subr.mxu0 0.0
    %784 = vmatpush1.msra.mxu0 0.0
    %785 = vmatprep.subr.mxu0 0.0
    %786 = vmatpush1.msra.mxu0 0.0
    %787 = vmatprep.subr.mxu0 0.0
    %788 = vmatpush1.msra.mxu0 0.0
    %789 = vmatprep.subr.mxu0 0.0
    %790 = vmatpush1.msra.mxu0 0.0
    %791 = vmatprep.subr.mxu0 0.0
    %792 = vmatpush1.msra.mxu0 0.0
    %793 = vmatprep.subr.mxu0 0.0
    %794 = vmatpush1.msra.mxu0 0.0
    %795 = vmatprep.subr.mxu0 0.0
    %796 = vmatpush1.msra.mxu0 0.0
    %797 = vmatprep.subr.mxu0 0.0
    %798 = vmatpush1.msra.mxu0 0.0
    %799 = vmatprep.subr.mxu0 0.0
    %800 = vmatpush1.msra.mxu0 0.0
    %801 = vmatprep.subr.mxu0 0.0
    %802 = vmatpush1.msra.mxu0 0.0
    %803 = vmatprep.subr.mxu0 0.0
    %804 = vmatpush1.msra.mxu0 0.0
    %805 = vmatprep.subr.mxu0 0.0
    %806 = vmatpush1.msra.mxu0 0.0
    %807 = vmatprep.subr.mxu0 0.0
    %808 = vmatpush1.msra.mxu0 0.0
    %809 = vmatprep.subr.mxu0 0.0
    %810 = vmatpush1.msra.mxu0 0.0
    %811 = vmatprep.subr.mxu0 0.0
    %812 = vmatpush1.msra.mxu0 0.0
    %813 = vmatprep.subr.mxu0 0.0
    %814 = vmatpush1.msra.mxu0 0.0
    %815 = vmatprep.subr.mxu0 0.0
    %816 = vmatpush1.msra.mxu0 0.0
    %817 = vmatprep.subr.mxu0 0.0
    %818 = vmatpush1.msra.mxu0 0.0
    %819 = vmatprep.subr.mxu0 0.0
    %820 = vmatpush1.msra.mxu0 0.0
    %821 = vmatprep.mubr.f32.mxu0 0.0
    %822 = vmatmul.mubr.f32.gmra.mrb[0].mxu0 %v755
    %v823 = vpop.f32.mrb[0].mxu0
    %v824 = vadd.f32 0.0, %v823
    %v825 = vpop.f32.mrb[0].mxu0
    %826 = vdwg.mxu0
    %v828 = vsel %vm425, %v584, 0
    %830 = vmatprep.subr.mxu0 0.0
    %831 = vmatpush1.msra.mxu0 %v418
    %832 = vmatprep.subr.mxu0 0.0
    %833 = vmatpush1.msra.mxu0 0.0
    %834 = vmatprep.subr.mxu0 0.0
    %835 = vmatpush1.msra.mxu0 0.0
    %836 = vmatprep.subr.mxu0 0.0
    %837 = vmatpush1.msra.mxu0 0.0
    %838 = vmatprep.subr.mxu0 0.0
    %839 = vmatpush1.msra.mxu0 0.0
    %840 = vmatprep.subr.mxu0 0.0
    %841 = vmatpush1.msra.mxu0 0.0
    %842 = vmatprep.subr.mxu0 0.0
    %843 = vmatpush1.msra.mxu0 0.0
    %844 = vmatprep.subr.mxu0 0.0
    %845 = vmatpush1.msra.mxu0 0.0
    %846 = vmatprep.subr.mxu0 0.0
    %847 = vmatpush1.msra.mxu0 0.0
    %848 = vmatprep.subr.mxu0 0.0
    %849 = vmatpush1.msra.mxu0 0.0
    %850 = vmatprep.subr.mxu0 0.0
    %851 = vmatpush1.msra.mxu0 0.0
    %852 = vmatprep.subr.mxu0 0.0
    %853 = vmatpush1.msra.mxu0 0.0
    %854 = vmatprep.subr.mxu0 0.0
    %855 = vmatpush1.msra.mxu0 0.0
    %856 = vmatprep.subr.mxu0 0.0
    %857 = vmatpush1.msra.mxu0 0.0
    %858 = vmatprep.subr.mxu0 0.0
    %859 = vmatpush1.msra.mxu0 0.0
    %860 = vmatprep.subr.mxu0 0.0
    %861 = vmatpush1.msra.mxu0 0.0
    %862 = vmatprep.subr.mxu0 0.0
    %863 = vmatpush1.msra.mxu0 0.0
    %864 = vmatprep.subr.mxu0 0.0
    %865 = vmatpush1.msra.mxu0 0.0
    %866 = vmatprep.subr.mxu0 0.0
    %867 = vmatpush1.msra.mxu0 0.0
    %868 = vmatprep.subr.mxu0 0.0
    %869 = vmatpush1.msra.mxu0 0.0
    %870 = vmatprep.subr.mxu0 0.0
    %871 = vmatpush1.msra.mxu0 0.0
    %872 = vmatprep.subr.mxu0 0.0
    %873 = vmatpush1.msra.mxu0 0.0
    %874 = vmatprep.subr.mxu0 0.0
    %875 = vmatpush1.msra.mxu0 0.0
    %876 = vmatprep.subr.mxu0 0.0
    %877 = vmatpush1.msra.mxu0 0.0
    %878 = vmatprep.subr.mxu0 0.0
    %879 = vmatpush1.msra.mxu0 0.0
    %880 = vmatprep.subr.mxu0 0.0
    %881 = vmatpush1.msra.mxu0 0.0
    %882 = vmatprep.subr.mxu0 0.0
    %883 = vmatpush1.msra.mxu0 0.0
    %884 = vmatprep.subr.mxu0 0.0
    %885 = vmatpush1.msra.mxu0 0.0
    %886 = vmatprep.subr.mxu0 0.0
    %887 = vmatpush1.msra.mxu0 0.0
    %888 = vmatprep.subr.mxu0 0.0
    %889 = vmatpush1.msra.mxu0 0.0
    %890 = vmatprep.subr.mxu0 0.0
    %891 = vmatpush1.msra.mxu0 0.0
    %892 = vmatprep.subr.mxu0 0.0
    %893 = vmatpush1.msra.mxu0 0.0
    %894 = vmatprep.mubr.f32.mxu0 0.0
    %895 = vmatmul.mubr.f32.gmra.mrb[0].mxu0 %v828
    %v896 = vpop.f32.mrb[0].mxu0
    %v897 = vadd.f32 %v824, %v896
    %v898 = vpop.f32.mrb[0].mxu0
    %899 = vdwg.mxu0
    %900 = vrot.lane.b32.xlu0 %v416, 112
    %v901 = vpop.permute.xlu0 %900
    %902 = vrot.lane.b32.xlu0 %v224, 112
    %v903 = vpop.permute.xlu0 %902
    %v904 = vsel %vm425, %v901, 0
    %v906 = vsel %vm425, %v903, 0
    %908 = vmatprep.subr.mxu0 0.0
    %909 = vmatpush1.xpose.msra.mxu0 %v906
    %910 = vmatprep.subr.mxu0 0.0
    %911 = vmatpush1.xpose.msra.mxu0 0.0
    %912 = vmatprep.subr.mxu0 0.0
    %913 = vmatpush1.xpose.msra.mxu0 0.0
    %914 = vmatprep.subr.mxu0 0.0
    %915 = vmatpush1.xpose.msra.mxu0 0.0
    %916 = vmatprep.subr.mxu0 0.0
    %917 = vmatpush1.xpose.msra.mxu0 0.0
    %918 = vmatprep.subr.mxu0 0.0
    %919 = vmatpush1.xpose.msra.mxu0 0.0
    %920 = vmatprep.subr.mxu0 0.0
    %921 = vmatpush1.xpose.msra.mxu0 0.0
    %922 = vmatprep.subr.mxu0 0.0
    %923 = vmatpush1.xpose.msra.mxu0 0.0
    %924 = vmatprep.subr.mxu0 0.0
    %925 = vmatpush1.xpose.msra.mxu0 0.0
    %926 = vmatprep.subr.mxu0 0.0
    %927 = vmatpush1.xpose.msra.mxu0 0.0
    %928 = vmatprep.subr.mxu0 0.0
    %929 = vmatpush1.xpose.msra.mxu0 0.0
    %930 = vmatprep.subr.mxu0 0.0
    %931 = vmatpush1.xpose.msra.mxu0 0.0
    %932 = vmatprep.subr.mxu0 0.0
    %933 = vmatpush1.xpose.msra.mxu0 0.0
    %934 = vmatprep.subr.mxu0 0.0
    %935 = vmatpush1.xpose.msra.mxu0 0.0
    %936 = vmatprep.subr.mxu0 0.0
    %937 = vmatpush1.xpose.msra.mxu0 0.0
    %938 = vmatprep.subr.mxu0 0.0
    %939 = vmatpush1.xpose.msra.mxu0 0.0
    %940 = vmatprep.subr.mxu0 0.0
    %941 = vmatpush1.xpose.msra.mxu0 0.0
    %942 = vmatprep.subr.mxu0 0.0
    %943 = vmatpush1.xpose.msra.mxu0 0.0
    %944 = vmatprep.subr.mxu0 0.0
    %945 = vmatpush1.xpose.msra.mxu0 0.0
    %946 = vmatprep.subr.mxu0 0.0
    %947 = vmatpush1.xpose.msra.mxu0 0.0
    %948 = vmatprep.subr.mxu0 0.0
    %949 = vmatpush1.xpose.msra.mxu0 0.0
    %950 = vmatprep.subr.mxu0 0.0
    %951 = vmatpush1.xpose.msra.mxu0 0.0
    %952 = vmatprep.subr.mxu0 0.0
    %953 = vmatpush1.xpose.msra.mxu0 0.0
    %954 = vmatprep.subr.mxu0 0.0
    %955 = vmatpush1.xpose.msra.mxu0 0.0
    %956 = vmatprep.subr.mxu0 0.0
    %957 = vmatpush1.xpose.msra.mxu0 0.0
    %958 = vmatprep.subr.mxu0 0.0
    %959 = vmatpush1.xpose.msra.mxu0 0.0
    %960 = vmatprep.subr.mxu0 0.0
    %961 = vmatpush1.xpose.msra.mxu0 0.0
    %962 = vmatprep.subr.mxu0 0.0
    %963 = vmatpush1.xpose.msra.mxu0 0.0
    %964 = vmatprep.subr.mxu0 0.0
    %965 = vmatpush1.xpose.msra.mxu0 0.0
    %966 = vmatprep.subr.mxu0 0.0
    %967 = vmatpush1.xpose.msra.mxu0 0.0
    %968 = vmatprep.subr.mxu0 0.0
    %969 = vmatpush1.xpose.msra.mxu0 0.0
    %970 = vmatprep.subr.mxu0 0.0
    %971 = vmatpush1.xpose.msra.mxu0 0.0
    %972 = vmatprep.mubr.f32.mxu0 0.0
    %973 = vmatmul.mubr.f32.gmra.mrb[0].mxu0 %v904
    %v974 = vpop.f32.mrb[0].mxu0
    %v975 = vadd.f32 0.0, %v974
    %v976 = vpop.f32.mrb[0].mxu0
    %977 = vdwg.mxu0
    %v978 = vsel %vm424, -3.4028235e+38, %v975
    %v979 = vsel %vm425, %v978, -inf
    %980 = vmax.xlane.f32.xlu0 %v979
    %v981 = vpop.xlane.xlu0 %980
    %v982 = vsub.f32 %v978, %v981
    %v983 = vmul.f32 %v982, 1.442695
    %v984 = vpow.pop %v983
    %v985 = vsel %vm425, %v984, 0.0
    %986 = vadd.xlane.f32.xlu0 %v985
    %v987 = vpop.xlane.xlu0 %986
    %v988 = vrcp.pop %v987
    %v989 = vmul.f32 %v984, %v988
    %990 = vrot.lane.b32.xlu0 %v316, 112
    %v991 = vpop.permute.xlu0 %990
    %v994 = vsel %vm425, %v989, 0
    %996 = vmatprep.subr.mxu0 0.0
    %997 = vmatpush1.msra.mxu0 %v991
    %998 = vmatprep.subr.mxu0 0.0
    %999 = vmatpush1.msra.mxu0 0.0
    %1000 = vmatprep.subr.mxu0 0.0
    %1001 = vmatpush1.msra.mxu0 0.0
    %1002 = vmatprep.subr.mxu0 0.0
    %1003 = vmatpush1.msra.mxu0 0.0
    %1004 = vmatprep.subr.mxu0 0.0
    %1005 = vmatpush1.msra.mxu0 0.0
    %1006 = vmatprep.subr.mxu0 0.0
    %1007 = vmatpush1.msra.mxu0 0.0
    %1008 = vmatprep.subr.mxu0 0.0
    %1009 = vmatpush1.msra.mxu0 0.0
    %1010 = vmatprep.subr.mxu0 0.0
    %1011 = vmatpush1.msra.mxu0 0.0
    %1012 = vmatprep.subr.mxu0 0.0
    %1013 = vmatpush1.msra.mxu0 0.0
    %1014 = vmatprep.subr.mxu0 0.0
    %1015 = vmatpush1.msra.mxu0 0.0
    %1016 = vmatprep.subr.mxu0 0.0
    %1017 = vmatpush1.msra.mxu0 0.0
    %1018 = vmatprep.subr.mxu0 0.0
    %1019 = vmatpush1.msra.mxu0 0.0
    %1020 = vmatprep.subr.mxu0 0.0
    %1021 = vmatpush1.msra.mxu0 0.0
    %1022 = vmatprep.subr.mxu0 0.0
    %1023 = vmatpush1.msra.mxu0 0.0
    %1024 = vmatprep.subr.mxu0 0.0
    %1025 = vmatpush1.msra.mxu0 0.0
    %1026 = vmatprep.subr.mxu0 0.0
    %1027 = vmatpush1.msra.mxu0 0.0
    %1028 = vmatprep.subr.mxu0 0.0
    %1029 = vmatpush1.msra.mxu0 0.0
    %1030 = vmatprep.subr.mxu0 0.0
    %1031 = vmatpush1.msra.mxu0 0.0
    %1032 = vmatprep.subr.mxu0 0.0
    %1033 = vmatpush1.msra.mxu0 0.0
    %1034 = vmatprep.subr.mxu0 0.0
    %1035 = vmatpush1.msra.mxu0 0.0
    %1036 = vmatprep.subr.mxu0 0.0
    %1037 = vmatpush1.msra.mxu0 0.0
    %1038 = vmatprep.subr.mxu0 0.0
    %1039 = vmatpush1.msra.mxu0 0.0
    %1040 = vmatprep.subr.mxu0 0.0
    %1041 = vmatpush1.msra.mxu0 0.0
    %1042 = vmatprep.subr.mxu0 0.0
    %1043 = vmatpush1.msra.mxu0 0.0
    %1044 = vmatprep.subr.mxu0 0.0
    %1045 = vmatpush1.msra.mxu0 0.0
    %1046 = vmatprep.subr.mxu0 0.0
    %1047 = vmatpush1.msra.mxu0 0.0
    %1048 = vmatprep.subr.mxu0 0.0
    %1049 = vmatpush1.msra.mxu0 0.0
    %1050 = vmatprep.subr.mxu0 0.0
    %1051 = vmatpush1.msra.mxu0 0.0
    %1052 = vmatprep.subr.mxu0 0.0
    %1053 = vmatpush1.msra.mxu0 0.0
    %1054 = vmatprep.subr.mxu0 0.0
    %1055 = vmatpush1.msra.mxu0 0.0
    %1056 = vmatprep.subr.mxu0 0.0
    %1057 = vmatpush1.msra.mxu0 0.0
    %1058 = vmatprep.subr.mxu0 0.0
    %1059 = vmatpush1.msra.mxu0 0.0
    %1060 = vmatprep.mubr.f32.mxu0 0.0
    %1061 = vmatmul.mubr.f32.gmra.mrb[0].mxu0 %v994
    %v1062 = vpop.f32.mrb[0].mxu0
    %v1063 = vadd.f32 0.0, %v1062
    %v1064 = vpop.f32.mrb[0].mxu0
    %1065 = vdwg.mxu0
    %v1067 = vsel %vm425, %v1063, 0
    %1069 = vmatprep.subr.mxu0 0.0
    %1070 = vmatpush1.msra.mxu0 %v420
    %1071 = vmatprep.subr.mxu0 0.0
    %1072 = vmatpush1.msra.mxu0 0.0
    %1073 = vmatprep.subr.mxu0 0.0
    %1074 = vmatpush1.msra.mxu0 0.0
    %1075 = vmatprep.subr.mxu0 0.0
    %1076 = vmatpush1.msra.mxu0 0.0
    %1077 = vmatprep.subr.mxu0 0.0
    %1078 = vmatpush1.msra.mxu0 0.0
    %1079 = vmatprep.subr.mxu0 0.0
    %1080 = vmatpush1.msra.mxu0 0.0
    %1081 = vmatprep.subr.mxu0 0.0
    %1082 = vmatpush1.msra.mxu0 0.0
    %1083 = vmatprep.subr.mxu0 0.0
    %1084 = vmatpush1.msra.mxu0 0.0
    %1085 = vmatprep.subr.mxu0 0.0
    %1086 = vmatpush1.msra.mxu0 0.0
    %1087 = vmatprep.subr.mxu0 0.0
    %1088 = vmatpush1.msra.mxu0 0.0
    %1089 = vmatprep.subr.mxu0 0.0
    %1090 = vmatpush1.msra.mxu0 0.0
    %1091 = vmatprep.subr.mxu0 0.0
    %1092 = vmatpush1.msra.mxu0 0.0
    %1093 = vmatprep.subr.mxu0 0.0
    %1094 = vmatpush1.msra.mxu0 0.0
    %1095 = vmatprep.subr.mxu0 0.0
    %1096 = vmatpush1.msra.mxu0 0.0
    %1097 = vmatprep.subr.mxu0 0.0
    %1098 = vmatpush1.msra.mxu0 0.0
    %1099 = vmatprep.subr.mxu0 0.0
    %1100 = vmatpush1.msra.mxu0 0.0
    %1101 = vmatprep.subr.mxu0 0.0
    %1102 = vmatpush1.msra.mxu0 0.0
    %1103 = vmatprep.subr.mxu0 0.0
    %1104 = vmatpush1.msra.mxu0 0.0
    %1105 = vmatprep.subr.mxu0 0.0
    %1106 = vmatpush1.msra.mxu0 0.0
    %1107 = vmatprep.subr.mxu0 0.0
    %1108 = vmatpush1.msra.mxu0 0.0
    %1109 = vmatprep.subr.mxu0 0.0
    %1110 = vmatpush1.msra.mxu0 0.0
    %1111 = vmatprep.subr.mxu0 0.0
    %1112 = vmatpush1.msra.mxu0 0.0
    %1113 = vmatprep.subr.mxu0 0.0
    %1114 = vmatpush1.msra.mxu0 0.0
    %1115 = vmatprep.subr.mxu0 0.0
    %1116 = vmatpush1.msra.mxu0 0.0
    %1117 = vmatprep.subr.mxu0 0.0
    %1118 = vmatpush1.msra.mxu0 0.0
    %1119 = vmatprep.subr.mxu0 0.0
    %1120 = vmatpush1.msra.mxu0 0.0
    %1121 = vmatprep.subr.mxu0 0.0
    %1122 = vmatpush1.msra.mxu0 0.0
    %1123 = vmatprep.subr.mxu0 0.0
    %1124 = vmatpush1.msra.mxu0 0.0
    %1125 = vmatprep.subr.mxu0 0.0
    %1126 = vmatpush1.msra.mxu0 0.0
    %1127 = vmatprep.subr.mxu0 0.0
    %1128 = vmatpush1.msra.mxu0 0.0
    %1129 = vmatprep.subr.mxu0 0.0
    %1130 = vmatpush1.msra.mxu0 0.0
    %1131 = vmatprep.subr.mxu0 0.0
    %1132 = vmatpush1.msra.mxu0 0.0
    %1133 = vmatprep.mubr.f32.mxu0 0.0
    %1134 = vmatmul.mubr.f32.gmra.mrb[0].mxu0 %v1067
    %v1135 = vpop.f32.mrb[0].mxu0
    %v1136 = vadd.f32 0.0, %v1135
    %v1137 = vpop.f32.mrb[0].mxu0
    %1138 = vdwg.mxu0
    %v1139 = vadd.f32 %v897, %v1136
    %1140 = vrot.lane.b32.xlu0 %v416, 104
    %v1141 = vpop.permute.xlu0 %1140
    %1142 = vrot.lane.b32.xlu0 %v224, 104
    %v1143 = vpop.permute.xlu0 %1142
    %v1144 = vsel %vm425, %v1141, 0
    %v1146 = vsel %vm425, %v1143, 0
    %1148 = vmatprep.subr.mxu0 0.0
    %1149 = vmatpush1.xpose.msra.mxu0 %v1146
    %1150 = vmatprep.subr.mxu0 0.0
    %1151 = vmatpush1.xpose.msra.mxu0 0.0
    %1152 = vmatprep.subr.mxu0 0.0
    %1153 = vmatpush1.xpose.msra.mxu0 0.0
    %1154 = vmatprep.subr.mxu0 0.0
    %1155 = vmatpush1.xpose.msra.mxu0 0.0
    %1156 = vmatprep.subr.mxu0 0.0
    %1157 = vmatpush1.xpose.msra.mxu0 0.0
    %1158 = vmatprep.subr.mxu0 0.0
    %1159 = vmatpush1.xpose.msra.mxu0 0.0
    %1160 = vmatprep.subr.mxu0 0.0
    %1161 = vmatpush1.xpose.msra.mxu0 0.0
    %1162 = vmatprep.subr.mxu0 0.0
    %1163 = vmatpush1.xpose.msra.mxu0 0.0
    %1164 = vmatprep.subr.mxu0 0.0
    %1165 = vmatpush1.xpose.msra.mxu0 0.0
    %1166 = vmatprep.subr.mxu0 0.0
    %1167 = vmatpush1.xpose.msra.mxu0 0.0
    %1168 = vmatprep.subr.mxu0 0.0
    %1169 = vmatpush1.xpose.msra.mxu0 0.0
    %1170 = vmatprep.subr.mxu0 0.0
    %1171 = vmatpush1.xpose.msra.mxu0 0.0
    %1172 = vmatprep.subr.mxu0 0.0
    %1173 = vmatpush1.xpose.msra.mxu0 0.0
    %1174 = vmatprep.subr.mxu0 0.0
    %1175 = vmatpush1.xpose.msra.mxu0 0.0
    %1176 = vmatprep.subr.mxu0 0.0
    %1177 = vmatpush1.xpose.msra.mxu0 0.0
    %1178 = vmatprep.subr.mxu0 0.0
    %1179 = vmatpush1.xpose.msra.mxu0 0.0
    %1180 = vmatprep.subr.mxu0 0.0
    %1181 = vmatpush1.xpose.msra.mxu0 0.0
    %1182 = vmatprep.subr.mxu0 0.0
    %1183 = vmatpush1.xpose.msra.mxu0 0.0
    %1184 = vmatprep.subr.mxu0 0.0
    %1185 = vmatpush1.xpose.msra.mxu0 0.0
    %1186 = vmatprep.subr.mxu0 0.0
    %1187 = vmatpush1.xpose.msra.mxu0 0.0
    %1188 = vmatprep.subr.mxu0 0.0
    %1189 = vmatpush1.xpose.msra.mxu0 0.0
    %1190 = vmatprep.subr.mxu0 0.0
    %1191 = vmatpush1.xpose.msra.mxu0 0.0
    %1192 = vmatprep.subr.mxu0 0.0
    %1193 = vmatpush1.xpose.msra.mxu0 0.0
    %1194 = vmatprep.subr.mxu0 0.0
    %1195 = vmatpush1.xpose.msra.mxu0 0.0
    %1196 = vmatprep.subr.mxu0 0.0
    %1197 = vmatpush1.xpose.msra.mxu0 0.0
    %1198 = vmatprep.subr.mxu0 0.0
    %1199 = vmatpush1.xpose.msra.mxu0 0.0
    %1200 = vmatprep.subr.mxu0 0.0
    %1201 = vmatpush1.xpose.msra.mxu0 0.0
    %1202 = vmatprep.subr.mxu0 0.0
    %1203 = vmatpush1.xpose.msra.mxu0 0.0
    %1204 = vmatprep.subr.mxu0 0.0
    %1205 = vmatpush1.xpose.msra.mxu0 0.0
    %1206 = vmatprep.subr.mxu0 0.0
    %1207 = vmatpush1.xpose.msra.mxu0 0.0
    %1208 = vmatprep.subr.mxu0 0.0
    %1209 = vmatpush1.xpose.msra.mxu0 0.0
    %1210 = vmatprep.subr.mxu0 0.0
    %1211 = vmatpush1.xpose.msra.mxu0 0.0
    %1212 = vmatprep.mubr.f32.mxu0 0.0
    %1213 = vmatmul.mubr.f32.gmra.mrb[0].mxu0 %v1144
    %v1214 = vpop.f32.mrb[0].mxu0
    %v1215 = vadd.f32 0.0, %v1214
    %v1216 = vpop.f32.mrb[0].mxu0
    %1217 = vdwg.mxu0
    %v1218 = vsel %vm424, -3.4028235e+38, %v1215
    %v1219 = vsel %vm425, %v1218, -inf
    %1220 = vmax.xlane.f32.xlu0 %v1219
    %v1221 = vpop.xlane.xlu0 %1220
    %v1222 = vsub.f32 %v1218, %v1221
    %v1223 = vmul.f32 %v1222, 1.442695
    %v1224 = vpow.pop %v1223
    %v1225 = vsel %vm425, %v1224, 0.0
    %1226 = vadd.xlane.f32.xlu0 %v1225
    %v1227 = vpop.xlane.xlu0 %1226
    %v1228 = vrcp.pop %v1227
    %v1229 = vmul.f32 %v1224, %v1228
    %1230 = vrot.lane.b32.xlu0 %v316, 104
    %v1231 = vpop.permute.xlu0 %1230
    %v1234 = vsel %vm425, %v1229, 0
    %1236 = vmatprep.subr.mxu0 0.0
    %1237 = vmatpush1.msra.mxu0 %v1231
    %1238 = vmatprep.subr.mxu0 0.0
    %1239 = vmatpush1.msra.mxu0 0.0
    %1240 = vmatprep.subr.mxu0 0.0
    %1241 = vmatpush1.msra.mxu0 0.0
    %1242 = vmatprep.subr.mxu0 0.0
    %1243 = vmatpush1.msra.mxu0 0.0
    %1244 = vmatprep.subr.mxu0 0.0
    %1245 = vmatpush1.msra.mxu0 0.0
    %1246 = vmatprep.subr.mxu0 0.0
    %1247 = vmatpush1.msra.mxu0 0.0
    %1248 = vmatprep.subr.mxu0 0.0
    %1249 = vmatpush1.msra.mxu0 0.0
    %1250 = vmatprep.subr.mxu0 0.0
    %1251 = vmatpush1.msra.mxu0 0.0
    %1252 = vmatprep.subr.mxu0 0.0
    %1253 = vmatpush1.msra.mxu0 0.0
    %1254 = vmatprep.subr.mxu0 0.0
    %1255 = vmatpush1.msra.mxu0 0.0
    %1256 = vmatprep.subr.mxu0 0.0
    %1257 = vmatpush1.msra.mxu0 0.0
    %1258 = vmatprep.subr.mxu0 0.0
    %1259 = vmatpush1.msra.mxu0 0.0
    %1260 = vmatprep.subr.mxu0 0.0
    %1261 = vmatpush1.msra.mxu0 0.0
    %1262 = vmatprep.subr.mxu0 0.0
    %1263 = vmatpush1.msra.mxu0 0.0
    %1264 = vmatprep.subr.mxu0 0.0
    %1265 = vmatpush1.msra.mxu0 0.0
    %1266 = vmatprep.subr.mxu0 0.0
    %1267 = vmatpush1.msra.mxu0 0.0
    %1268 = vmatprep.subr.mxu0 0.0
    %1269 = vmatpush1.msra.mxu0 0.0
    %1270 = vmatprep.subr.mxu0 0.0
    %1271 = vmatpush1.msra.mxu0 0.0
    %1272 = vmatprep.subr.mxu0 0.0
    %1273 = vmatpush1.msra.mxu0 0.0
    %1274 = vmatprep.subr.mxu0 0.0
    %1275 = vmatpush1.msra.mxu0 0.0
    %1276 = vmatprep.subr.mxu0 0.0
    %1277 = vmatpush1.msra.mxu0 0.0
    %1278 = vmatprep.subr.mxu0 0.0
    %1279 = vmatpush1.msra.mxu0 0.0
    %1280 = vmatprep.subr.mxu0 0.0
    %1281 = vmatpush1.msra.mxu0 0.0
    %1282 = vmatprep.subr.mxu0 0.0
    %1283 = vmatpush1.msra.mxu0 0.0
    %1284 = vmatprep.subr.mxu0 0.0
    %1285 = vmatpush1.msra.mxu0 0.0
    %1286 = vmatprep.subr.mxu0 0.0
    %1287 = vmatpush1.msra.mxu0 0.0
    %1288 = vmatprep.subr.mxu0 0.0
    %1289 = vmatpush1.msra.mxu0 0.0
    %1290 = vmatprep.subr.mxu0 0.0
    %1291 = vmatpush1.msra.mxu0 0.0
    %1292 = vmatprep.subr.mxu0 0.0
    %1293 = vmatpush1.msra.mxu0 0.0
    %1294 = vmatprep.subr.mxu0 0.0
    %1295 = vmatpush1.msra.mxu0 0.0
    %1296 = vmatprep.subr.mxu0 0.0
    %1297 = vmatpush1.msra.mxu0 0.0
    %1298 = vmatprep.subr.mxu0 0.0
    %1299 = vmatpush1.msra.mxu0 0.0
    %1300 = vmatprep.mubr.f32.mxu0 0.0
    %1301 = vmatmul.mubr.f32.gmra.mrb[0].mxu0 %v1234
    %v1302 = vpop.f32.mrb[0].mxu0
    %v1303 = vadd.f32 0.0, %v1302
    %v1304 = vpop.f32.mrb[0].mxu0
    %1305 = vdwg.mxu0
    %v1307 = vsel %vm425, %v1303, 0
    %1309 = vmatprep.subr.mxu0 0.0
    %1310 = vmatpush1.msra.mxu0 %v421
    %1311 = vmatprep.subr.mxu0 0.0
    %1312 = vmatpush1.msra.mxu0 0.0
    %1313 = vmatprep.subr.mxu0 0.0
    %1314 = vmatpush1.msra.mxu0 0.0
    %1315 = vmatprep.subr.mxu0 0.0
    %1316 = vmatpush1.msra.mxu0 0.0
    %1317 = vmatprep.subr.mxu0 0.0
    %1318 = vmatpush1.msra.mxu0 0.0
    %1319 = vmatprep.subr.mxu0 0.0
    %1320 = vmatpush1.msra.mxu0 0.0
    %1321 = vmatprep.subr.mxu0 0.0
    %1322 = vmatpush1.msra.mxu0 0.0
    %1323 = vmatprep.subr.mxu0 0.0
    %1324 = vmatpush1.msra.mxu0 0.0
    %1325 = vmatprep.subr.mxu0 0.0
    %1326 = vmatpush1.msra.mxu0 0.0
    %1327 = vmatprep.subr.mxu0 0.0
    %1328 = vmatpush1.msra.mxu0 0.0
    %1329 = vmatprep.subr.mxu0 0.0
    %1330 = vmatpush1.msra.mxu0 0.0
    %1331 = vmatprep.subr.mxu0 0.0
    %1332 = vmatpush1.msra.mxu0 0.0
    %1333 = vmatprep.subr.mxu0 0.0
    %1334 = vmatpush1.msra.mxu0 0.0
    %1335 = vmatprep.subr.mxu0 0.0
    %1336 = vmatpush1.msra.mxu0 0.0
    %1337 = vmatprep.subr.mxu0 0.0
    %1338 = vmatpush1.msra.mxu0 0.0
    %1339 = vmatprep.subr.mxu0 0.0
    %1340 = vmatpush1.msra.mxu0 0.0
    %1341 = vmatprep.subr.mxu0 0.0
    %1342 = vmatpush1.msra.mxu0 0.0
    %1343 = vmatprep.subr.mxu0 0.0
    %1344 = vmatpush1.msra.mxu0 0.0
    %1345 = vmatprep.subr.mxu0 0.0
    %1346 = vmatpush1.msra.mxu0 0.0
    %1347 = vmatprep.subr.mxu0 0.0
    %1348 = vmatpush1.msra.mxu0 0.0
    %1349 = vmatprep.subr.mxu0 0.0
    %1350 = vmatpush1.msra.mxu0 0.0
    %1351 = vmatprep.subr.mxu0 0.0
    %1352 = vmatpush1.msra.mxu0 0.0
    %1353 = vmatprep.subr.mxu0 0.0
    %1354 = vmatpush1.msra.mxu0 0.0
    %1355 = vmatprep.subr.mxu0 0.0
    %1356 = vmatpush1.msra.mxu0 0.0
    %1357 = vmatprep.subr.mxu0 0.0
    %1358 = vmatpush1.msra.mxu0 0.0
    %1359 = vmatprep.subr.mxu0 0.0
    %1360 = vmatpush1.msra.mxu0 0.0
    %1361 = vmatprep.subr.mxu0 0.0
    %1362 = vmatpush1.msra.mxu0 0.0
    %1363 = vmatprep.subr.mxu0 0.0
    %1364 = vmatpush1.msra.mxu0 0.0
    %1365 = vmatprep.subr.mxu0 0.0
    %1366 = vmatpush1.msra.mxu0 0.0
    %1367 = vmatprep.subr.mxu0 0.0
    %1368 = vmatpush1.msra.mxu0 0.0
    %1369 = vmatprep.subr.mxu0 0.0
    %1370 = vmatpush1.msra.mxu0 0.0
    %1371 = vmatprep.subr.mxu0 0.0
    %1372 = vmatpush1.msra.mxu0 0.0
    %1373 = vmatprep.mubr.f32.mxu0 0.0
    %1374 = vmatmul.mubr.f32.gmra.mrb[0].mxu0 %v1307
    %v1375 = vpop.f32.mrb[0].mxu0
    %v1376 = vadd.f32 0.0, %v1375
    %v1377 = vpop.f32.mrb[0].mxu0
    %1378 = vdwg.mxu0
    %v1379 = vadd.f32 %v1139, %v1376
    %v1381 = vlaneseq
    %v1382 = vshrl.u32 %v1381, 7
    %v1383 = vsub.s32 0, %v1382
    %v1384 = vrot.slane %v422, %v1383
    %v1386 = vadd.f32 %v1379, %v1384
    %s1387 = scalar_lea.vmem [#allocation8], 8
    %v1388 = vld [vmem:[%s1387] sm:$0xff]
    %vm1389 = vcmp.eq.f32.partialorder %v1388, 0.0
    %v1391 = vsel %vm425, %v417, 0
    %v1394 = vsel %vm425, %v229, 0
    %1396 = vmatprep.subr.mxu0 0.0
    %1397 = vmatpush1.xpose.msra.mxu0 %v1394
    %1398 = vmatprep.subr.mxu0 0.0
    %1399 = vmatpush1.xpose.msra.mxu0 0.0
    %1400 = vmatprep.subr.mxu0 0.0
    %1401 = vmatpush1.xpose.msra.mxu0 0.0
    %1402 = vmatprep.subr.mxu0 0.0
    %1403 = vmatpush1.xpose.msra.mxu0 0.0
    %1404 = vmatprep.subr.mxu0 0.0
    %1405 = vmatpush1.xpose.msra.mxu0 0.0
    %1406 = vmatprep.subr.mxu0 0.0
    %1407 = vmatpush1.xpose.msra.mxu0 0.0
    %1408 = vmatprep.subr.mxu0 0.0
    %1409 = vmatpush1.xpose.msra.mxu0 0.0
    %1410 = vmatprep.subr.mxu0 0.0
    %1411 = vmatpush1.xpose.msra.mxu0 0.0
    %1412 = vmatprep.subr.mxu0 0.0
    %1413 = vmatpush1.xpose.msra.mxu0 0.0
    %1414 = vmatprep.subr.mxu0 0.0
    %1415 = vmatpush1.xpose.msra.mxu0 0.0
    %1416 = vmatprep.subr.mxu0 0.0
    %1417 = vmatpush1.xpose.msra.mxu0 0.0
    %1418 = vmatprep.subr.mxu0 0.0
    %1419 = vmatpush1.xpose.msra.mxu0 0.0
    %1420 = vmatprep.subr.mxu0 0.0
    %1421 = vmatpush1.xpose.msra.mxu0 0.0
    %1422 = vmatprep.subr.mxu0 0.0
    %1423 = vmatpush1.xpose.msra.mxu0 0.0
    %1424 = vmatprep.subr.mxu0 0.0
    %1425 = vmatpush1.xpose.msra.mxu0 0.0
    %1426 = vmatprep.subr.mxu0 0.0
    %1427 = vmatpush1.xpose.msra.mxu0 0.0
    %1428 = vmatprep.subr.mxu0 0.0
    %1429 = vmatpush1.xpose.msra.mxu0 0.0
    %1430 = vmatprep.subr.mxu0 0.0
    %1431 = vmatpush1.xpose.msra.mxu0 0.0
    %1432 = vmatprep.subr.mxu0 0.0
    %1433 = vmatpush1.xpose.msra.mxu0 0.0
    %1434 = vmatprep.subr.mxu0 0.0
    %1435 = vmatpush1.xpose.msra.mxu0 0.0
    %1436 = vmatprep.subr.mxu0 0.0
    %1437 = vmatpush1.xpose.msra.mxu0 0.0
    %1438 = vmatprep.subr.mxu0 0.0
    %1439 = vmatpush1.xpose.msra.mxu0 0.0
    %1440 = vmatprep.subr.mxu0 0.0
    %1441 = vmatpush1.xpose.msra.mxu0 0.0
    %1442 = vmatprep.subr.mxu0 0.0
    %1443 = vmatpush1.xpose.msra.mxu0 0.0
    %1444 = vmatprep.subr.mxu0 0.0
    %1445 = vmatpush1.xpose.msra.mxu0 0.0
    %1446 = vmatprep.subr.mxu0 0.0
    %1447 = vmatpush1.xpose.msra.mxu0 0.0
    %1448 = vmatprep.subr.mxu0 0.0
    %1449 = vmatpush1.xpose.msra.mxu0 0.0
    %1450 = vmatprep.subr.mxu0 0.0
    %1451 = vmatpush1.xpose.msra.mxu0 0.0
    %1452 = vmatprep.subr.mxu0 0.0
    %1453 = vmatpush1.xpose.msra.mxu0 0.0
    %1454 = vmatprep.subr.mxu0 0.0
    %1455 = vmatpush1.xpose.msra.mxu0 0.0
    %1456 = vmatprep.subr.mxu0 0.0
    %1457 = vmatpush1.xpose.msra.mxu0 0.0
    %1458 = vmatprep.subr.mxu0 0.0
    %1459 = vmatpush1.xpose.msra.mxu0 0.0
    %1460 = vmatprep.mubr.f32.mxu0 0.0
    %1461 = vmatmul.mubr.f32.gmra.mrb[0].mxu0 %v1391
    %v1462 = vpop.f32.mrb[0].mxu0
    %v1463 = vadd.f32 0.0, %v1462
    %v1464 = vpop.f32.mrb[0].mxu0
    %1465 = vdwg.mxu0
    %v1466 = vsel %vm1389, -3.4028235e+38, %v1463
    %v1467 = vsel %vm425, %v1466, -inf
    %1468 = vmax.xlane.f32.xlu0 %v1467
    %v1469 = vpop.xlane.xlu0 %1468
    %v1470 = vsub.f32 %v1466, %v1469
    %v1471 = vmul.f32 %v1470, 1.442695
    %v1472 = vpow.pop %v1471
    %v1473 = vsel %vm425, %v1472, 0.0
    %1474 = vadd.xlane.f32.xlu0 %v1473
    %v1475 = vpop.xlane.xlu0 %1474
    %v1476 = vrcp.pop %v1475
    %v1477 = vmul.f32 %v1472, %v1476
    %v1479 = vsel %vm425, %v1477, 0
    %1481 = vmatprep.subr.mxu0 0.0
    %1482 = vmatpush1.msra.mxu0 %v321
    %1483 = vmatprep.subr.mxu0 0.0
    %1484 = vmatpush1.msra.mxu0 0.0
    %1485 = vmatprep.subr.mxu0 0.0
    %1486 = vmatpush1.msra.mxu0 0.0
    %1487 = vmatprep.subr.mxu0 0.0
    %1488 = vmatpush1.msra.mxu0 0.0
    %1489 = vmatprep.subr.mxu0 0.0
    %1490 = vmatpush1.msra.mxu0 0.0
    %1491 = vmatprep.subr.mxu0 0.0
    %1492 = vmatpush1.msra.mxu0 0.0
    %1493 = vmatprep.subr.mxu0 0.0
    %1494 = vmatpush1.msra.mxu0 0.0
    %1495 = vmatprep.subr.mxu0 0.0
    %1496 = vmatpush1.msra.mxu0 0.0
    %1497 = vmatprep.subr.mxu0 0.0
    %1498 = vmatpush1.msra.mxu0 0.0
    %1499 = vmatprep.subr.mxu0 0.0
    %1500 = vmatpush1.msra.mxu0 0.0
    %1501 = vmatprep.subr.mxu0 0.0
    %1502 = vmatpush1.msra.mxu0 0.0
    %1503 = vmatprep.subr.mxu0 0.0
    %1504 = vmatpush1.msra.mxu0 0.0
    %1505 = vmatprep.subr.mxu0 0.0
    %1506 = vmatpush1.msra.mxu0 0.0
    %1507 = vmatprep.subr.mxu0 0.0
    %1508 = vmatpush1.msra.mxu0 0.0
    %1509 = vmatprep.subr.mxu0 0.0
    %1510 = vmatpush1.msra.mxu0 0.0
    %1511 = vmatprep.subr.mxu0 0.0
    %1512 = vmatpush1.msra.mxu0 0.0
    %1513 = vmatprep.subr.mxu0 0.0
    %1514 = vmatpush1.msra.mxu0 0.0
    %1515 = vmatprep.subr.mxu0 0.0
    %1516 = vmatpush1.msra.mxu0 0.0
    %1517 = vmatprep.subr.mxu0 0.0
    %1518 = vmatpush1.msra.mxu0 0.0
    %1519 = vmatprep.subr.mxu0 0.0
    %1520 = vmatpush1.msra.mxu0 0.0
    %1521 = vmatprep.subr.mxu0 0.0
    %1522 = vmatpush1.msra.mxu0 0.0
    %1523 = vmatprep.subr.mxu0 0.0
    %1524 = vmatpush1.msra.mxu0 0.0
    %1525 = vmatprep.subr.mxu0 0.0
    %1526 = vmatpush1.msra.mxu0 0.0
    %1527 = vmatprep.subr.mxu0 0.0
    %1528 = vmatpush1.msra.mxu0 0.0
    %1529 = vmatprep.subr.mxu0 0.0
    %1530 = vmatpush1.msra.mxu0 0.0
    %1531 = vmatprep.subr.mxu0 0.0
    %1532 = vmatpush1.msra.mxu0 0.0
    %1533 = vmatprep.subr.mxu0 0.0
    %1534 = vmatpush1.msra.mxu0 0.0
    %1535 = vmatprep.subr.mxu0 0.0
    %1536 = vmatpush1.msra.mxu0 0.0
    %1537 = vmatprep.subr.mxu0 0.0
    %1538 = vmatpush1.msra.mxu0 0.0
    %1539 = vmatprep.subr.mxu0 0.0
    %1540 = vmatpush1.msra.mxu0 0.0
    %1541 = vmatprep.subr.mxu0 0.0
    %1542 = vmatpush1.msra.mxu0 0.0
    %1543 = vmatprep.subr.mxu0 0.0
    %1544 = vmatpush1.msra.mxu0 0.0
    %1545 = vmatprep.mubr.f32.mxu0 0.0
    %1546 = vmatmul.mubr.f32.gmra.mrb[0].mxu0 %v1479
    %v1547 = vpop.f32.mrb[0].mxu0
    %v1548 = vadd.f32 0.0, %v1547
    %v1549 = vpop.f32.mrb[0].mxu0
    %1550 = vdwg.mxu0
    %1551 = vrot.lane.b32.xlu0 %v417, 120
    %v1552 = vpop.permute.xlu0 %1551
    %1553 = vrot.lane.b32.xlu0 %v229, 120
    %v1554 = vpop.permute.xlu0 %1553
    %v1555 = vsel %vm425, %v1552, 0
    %v1557 = vsel %vm425, %v1554, 0
    %1559 = vmatprep.subr.mxu0 0.0
    %1560 = vmatpush1.xpose.msra.mxu0 %v1557
    %1561 = vmatprep.subr.mxu0 0.0
    %1562 = vmatpush1.xpose.msra.mxu0 0.0
    %1563 = vmatprep.subr.mxu0 0.0
    %1564 = vmatpush1.xpose.msra.mxu0 0.0
    %1565 = vmatprep.subr.mxu0 0.0
    %1566 = vmatpush1.xpose.msra.mxu0 0.0
    %1567 = vmatprep.subr.mxu0 0.0
    %1568 = vmatpush1.xpose.msra.mxu0 0.0
    %1569 = vmatprep.subr.mxu0 0.0
    %1570 = vmatpush1.xpose.msra.mxu0 0.0
    %1571 = vmatprep.subr.mxu0 0.0
    %1572 = vmatpush1.xpose.msra.mxu0 0.0
    %1573 = vmatprep.subr.mxu0 0.0
    %1574 = vmatpush1.xpose.msra.mxu0 0.0
    %1575 = vmatprep.subr.mxu0 0.0
    %1576 = vmatpush1.xpose.msra.mxu0 0.0
    %1577 = vmatprep.subr.mxu0 0.0
    %1578 = vmatpush1.xpose.msra.mxu0 0.0
    %1579 = vmatprep.subr.mxu0 0.0
    %1580 = vmatpush1.xpose.msra.mxu0 0.0
    %1581 = vmatprep.subr.mxu0 0.0
    %1582 = vmatpush1.xpose.msra.mxu0 0.0
    %1583 = vmatprep.subr.mxu0 0.0
    %1584 = vmatpush1.xpose.msra.mxu0 0.0
    %1585 = vmatprep.subr.mxu0 0.0
    %1586 = vmatpush1.xpose.msra.mxu0 0.0
    %1587 = vmatprep.subr.mxu0 0.0
    %1588 = vmatpush1.xpose.msra.mxu0 0.0
    %1589 = vmatprep.subr.mxu0 0.0
    %1590 = vmatpush1.xpose.msra.mxu0 0.0
    %1591 = vmatprep.subr.mxu0 0.0
    %1592 = vmatpush1.xpose.msra.mxu0 0.0
    %1593 = vmatprep.subr.mxu0 0.0
    %1594 = vmatpush1.xpose.msra.mxu0 0.0
    %1595 = vmatprep.subr.mxu0 0.0
    %1596 = vmatpush1.xpose.msra.mxu0 0.0
    %1597 = vmatprep.subr.mxu0 0.0
    %1598 = vmatpush1.xpose.msra.mxu0 0.0
    %1599 = vmatprep.subr.mxu0 0.0
    %1600 = vmatpush1.xpose.msra.mxu0 0.0
    %1601 = vmatprep.subr.mxu0 0.0
    %1602 = vmatpush1.xpose.msra.mxu0 0.0
    %1603 = vmatprep.subr.mxu0 0.0
    %1604 = vmatpush1.xpose.msra.mxu0 0.0
    %1605 = vmatprep.subr.mxu0 0.0
    %1606 = vmatpush1.xpose.msra.mxu0 0.0
    %1607 = vmatprep.subr.mxu0 0.0
    %1608 = vmatpush1.xpose.msra.mxu0 0.0
    %1609 = vmatprep.subr.mxu0 0.0
    %1610 = vmatpush1.xpose.msra.mxu0 0.0
    %1611 = vmatprep.subr.mxu0 0.0
    %1612 = vmatpush1.xpose.msra.mxu0 0.0
    %1613 = vmatprep.subr.mxu0 0.0
    %1614 = vmatpush1.xpose.msra.mxu0 0.0
    %1615 = vmatprep.subr.mxu0 0.0
    %1616 = vmatpush1.xpose.msra.mxu0 0.0
    %1617 = vmatprep.subr.mxu0 0.0
    %1618 = vmatpush1.xpose.msra.mxu0 0.0
    %1619 = vmatprep.subr.mxu0 0.0
    %1620 = vmatpush1.xpose.msra.mxu0 0.0
    %1621 = vmatprep.subr.mxu0 0.0
    %1622 = vmatpush1.xpose.msra.mxu0 0.0
    %1623 = vmatprep.mubr.f32.mxu0 0.0
    %1624 = vmatmul.mubr.f32.gmra.mrb[0].mxu0 %v1555
    %v1625 = vpop.f32.mrb[0].mxu0
    %v1626 = vadd.f32 0.0, %v1625
    %v1627 = vpop.f32.mrb[0].mxu0
    %1628 = vdwg.mxu0
    %v1629 = vsel %vm1389, -3.4028235e+38, %v1626
    %v1630 = vsel %vm425, %v1629, -inf
    %1631 = vmax.xlane.f32.xlu0 %v1630
    %v1632 = vpop.xlane.xlu0 %1631
    %v1633 = vsub.f32 %v1629, %v1632
    %v1634 = vmul.f32 %v1633, 1.442695
    %v1635 = vpow.pop %v1634
    %v1636 = vsel %vm425, %v1635, 0.0
    %1637 = vadd.xlane.f32.xlu0 %v1636
    %v1638 = vpop.xlane.xlu0 %1637
    %v1639 = vrcp.pop %v1638
    %v1640 = vmul.f32 %v1635, %v1639
    %1642 = vrot.lane.b32.xlu0 %v321, 120
    %v1643 = vpop.permute.xlu0 %1642
    %v1646 = vsel %vm425, %v1640, 0
    %1648 = vmatprep.subr.mxu0 0.0
    %1649 = vmatpush1.msra.mxu0 %v1643
    %1650 = vmatprep.subr.mxu0 0.0
    %1651 = vmatpush1.msra.mxu0 0.0
    %1652 = vmatprep.subr.mxu0 0.0
    %1653 = vmatpush1.msra.mxu0 0.0
    %1654 = vmatprep.subr.mxu0 0.0
    %1655 = vmatpush1.msra.mxu0 0.0
    %1656 = vmatprep.subr.mxu0 0.0
    %1657 = vmatpush1.msra.mxu0 0.0
    %1658 = vmatprep.subr.mxu0 0.0
    %1659 = vmatpush1.msra.mxu0 0.0
    %1660 = vmatprep.subr.mxu0 0.0
    %1661 = vmatpush1.msra.mxu0 0.0
    %1662 = vmatprep.subr.mxu0 0.0
    %1663 = vmatpush1.msra.mxu0 0.0
    %1664 = vmatprep.subr.mxu0 0.0
    %1665 = vmatpush1.msra.mxu0 0.0
    %1666 = vmatprep.subr.mxu0 0.0
    %1667 = vmatpush1.msra.mxu0 0.0
    %1668 = vmatprep.subr.mxu0 0.0
    %1669 = vmatpush1.msra.mxu0 0.0
    %1670 = vmatprep.subr.mxu0 0.0
    %1671 = vmatpush1.msra.mxu0 0.0
    %1672 = vmatprep.subr.mxu0 0.0
    %1673 = vmatpush1.msra.mxu0 0.0
    %1674 = vmatprep.subr.mxu0 0.0
    %1675 = vmatpush1.msra.mxu0 0.0
    %1676 = vmatprep.subr.mxu0 0.0
    %1677 = vmatpush1.msra.mxu0 0.0
    %1678 = vmatprep.subr.mxu0 0.0
    %1679 = vmatpush1.msra.mxu0 0.0
    %1680 = vmatprep.subr.mxu0 0.0
    %1681 = vmatpush1.msra.mxu0 0.0
    %1682 = vmatprep.subr.mxu0 0.0
    %1683 = vmatpush1.msra.mxu0 0.0
    %1684 = vmatprep.subr.mxu0 0.0
    %1685 = vmatpush1.msra.mxu0 0.0
    %1686 = vmatprep.subr.mxu0 0.0
    %1687 = vmatpush1.msra.mxu0 0.0
    %1688 = vmatprep.subr.mxu0 0.0
    %1689 = vmatpush1.msra.mxu0 0.0
    %1690 = vmatprep.subr.mxu0 0.0
    %1691 = vmatpush1.msra.mxu0 0.0
    %1692 = vmatprep.subr.mxu0 0.0
    %1693 = vmatpush1.msra.mxu0 0.0
    %1694 = vmatprep.subr.mxu0 0.0
    %1695 = vmatpush1.msra.mxu0 0.0
    %1696 = vmatprep.subr.mxu0 0.0
    %1697 = vmatpush1.msra.mxu0 0.0
    %1698 = vmatprep.subr.mxu0 0.0
    %1699 = vmatpush1.msra.mxu0 0.0
    %1700 = vmatprep.subr.mxu0 0.0
    %1701 = vmatpush1.msra.mxu0 0.0
    %1702 = vmatprep.subr.mxu0 0.0
    %1703 = vmatpush1.msra.mxu0 0.0
    %1704 = vmatprep.subr.mxu0 0.0
    %1705 = vmatpush1.msra.mxu0 0.0
    %1706 = vmatprep.subr.mxu0 0.0
    %1707 = vmatpush1.msra.mxu0 0.0
    %1708 = vmatprep.subr.mxu0 0.0
    %1709 = vmatpush1.msra.mxu0 0.0
    %1710 = vmatprep.subr.mxu0 0.0
    %1711 = vmatpush1.msra.mxu0 0.0
    %1712 = vmatprep.mubr.f32.mxu0 0.0
    %1713 = vmatmul.mubr.f32.gmra.mrb[0].mxu0 %v1646
    %v1714 = vpop.f32.mrb[0].mxu0
    %v1715 = vadd.f32 0.0, %v1714
    %v1716 = vpop.f32.mrb[0].mxu0
    %1717 = vdwg.mxu0
    %v1719 = vsel %vm425, %v1715, 0
    %1721 = vmatprep.subr.mxu0 0.0
    %1722 = vmatpush1.msra.mxu0 %v419
    %1723 = vmatprep.subr.mxu0 0.0
    %1724 = vmatpush1.msra.mxu0 0.0
    %1725 = vmatprep.subr.mxu0 0.0
    %1726 = vmatpush1.msra.mxu0 0.0
    %1727 = vmatprep.subr.mxu0 0.0
    %1728 = vmatpush1.msra.mxu0 0.0
    %1729 = vmatprep.subr.mxu0 0.0
    %1730 = vmatpush1.msra.mxu0 0.0
    %1731 = vmatprep.subr.mxu0 0.0
    %1732 = vmatpush1.msra.mxu0 0.0
    %1733 = vmatprep.subr.mxu0 0.0
    %1734 = vmatpush1.msra.mxu0 0.0
    %1735 = vmatprep.subr.mxu0 0.0
    %1736 = vmatpush1.msra.mxu0 0.0
    %1737 = vmatprep.subr.mxu0 0.0
    %1738 = vmatpush1.msra.mxu0 0.0
    %1739 = vmatprep.subr.mxu0 0.0
    %1740 = vmatpush1.msra.mxu0 0.0
    %1741 = vmatprep.subr.mxu0 0.0
    %1742 = vmatpush1.msra.mxu0 0.0
    %1743 = vmatprep.subr.mxu0 0.0
    %1744 = vmatpush1.msra.mxu0 0.0
    %1745 = vmatprep.subr.mxu0 0.0
    %1746 = vmatpush1.msra.mxu0 0.0
    %1747 = vmatprep.subr.mxu0 0.0
    %1748 = vmatpush1.msra.mxu0 0.0
    %1749 = vmatprep.subr.mxu0 0.0
    %1750 = vmatpush1.msra.mxu0 0.0
    %1751 = vmatprep.subr.mxu0 0.0
    %1752 = vmatpush1.msra.mxu0 0.0
    %1753 = vmatprep.subr.mxu0 0.0
    %1754 = vmatpush1.msra.mxu0 0.0
    %1755 = vmatprep.subr.mxu0 0.0
    %1756 = vmatpush1.msra.mxu0 0.0
    %1757 = vmatprep.subr.mxu0 0.0
    %1758 = vmatpush1.msra.mxu0 0.0
    %1759 = vmatprep.subr.mxu0 0.0
    %1760 = vmatpush1.msra.mxu0 0.0
    %1761 = vmatprep.subr.mxu0 0.0
    %1762 = vmatpush1.msra.mxu0 0.0
    %1763 = vmatprep.subr.mxu0 0.0
    %1764 = vmatpush1.msra.mxu0 0.0
    %1765 = vmatprep.subr.mxu0 0.0
    %1766 = vmatpush1.msra.mxu0 0.0
    %1767 = vmatprep.subr.mxu0 0.0
    %1768 = vmatpush1.msra.mxu0 0.0
    %1769 = vmatprep.subr.mxu0 0.0
    %1770 = vmatpush1.msra.mxu0 0.0
    %1771 = vmatprep.subr.mxu0 0.0
    %1772 = vmatpush1.msra.mxu0 0.0
    %1773 = vmatprep.subr.mxu0 0.0
    %1774 = vmatpush1.msra.mxu0 0.0
    %1775 = vmatprep.subr.mxu0 0.0
    %1776 = vmatpush1.msra.mxu0 0.0
    %1777 = vmatprep.subr.mxu0 0.0
    %1778 = vmatpush1.msra.mxu0 0.0
    %1779 = vmatprep.subr.mxu0 0.0
    %1780 = vmatpush1.msra.mxu0 0.0
    %1781 = vmatprep.subr.mxu0 0.0
    %1782 = vmatpush1.msra.mxu0 0.0
    %1783 = vmatprep.subr.mxu0 0.0
    %1784 = vmatpush1.msra.mxu0 0.0
    %1785 = vmatprep.mubr.f32.mxu0 0.0
    %1786 = vmatmul.mubr.f32.gmra.mrb[0].mxu0 %v1719
    %v1787 = vpop.f32.mrb[0].mxu0
    %v1788 = vadd.f32 0.0, %v1787
    %v1789 = vpop.f32.mrb[0].mxu0
    %1790 = vdwg.mxu0
    %v1792 = vsel %vm425, %v1548, 0
    %1794 = vmatprep.subr.mxu0 0.0
    %1795 = vmatpush1.msra.mxu0 %v418
    %1796 = vmatprep.subr.mxu0 0.0
    %1797 = vmatpush1.msra.mxu0 0.0
    %1798 = vmatprep.subr.mxu0 0.0
    %1799 = vmatpush1.msra.mxu0 0.0
    %1800 = vmatprep.subr.mxu0 0.0
    %1801 = vmatpush1.msra.mxu0 0.0
    %1802 = vmatprep.subr.mxu0 0.0
    %1803 = vmatpush1.msra.mxu0 0.0
    %1804 = vmatprep.subr.mxu0 0.0
    %1805 = vmatpush1.msra.mxu0 0.0
    %1806 = vmatprep.subr.mxu0 0.0
    %1807 = vmatpush1.msra.mxu0 0.0
    %1808 = vmatprep.subr.mxu0 0.0
    %1809 = vmatpush1.msra.mxu0 0.0
    %1810 = vmatprep.subr.mxu0 0.0
    %1811 = vmatpush1.msra.mxu0 0.0
    %1812 = vmatprep.subr.mxu0 0.0
    %1813 = vmatpush1.msra.mxu0 0.0
    %1814 = vmatprep.subr.mxu0 0.0
    %1815 = vmatpush1.msra.mxu0 0.0
    %1816 = vmatprep.subr.mxu0 0.0
    %1817 = vmatpush1.msra.mxu0 0.0
    %1818 = vmatprep.subr.mxu0 0.0
    %1819 = vmatpush1.msra.mxu0 0.0
    %1820 = vmatprep.subr.mxu0 0.0
    %1821 = vmatpush1.msra.mxu0 0.0
    %1822 = vmatprep.subr.mxu0 0.0
    %1823 = vmatpush1.msra.mxu0 0.0
    %1824 = vmatprep.subr.mxu0 0.0
    %1825 = vmatpush1.msra.mxu0 0.0
    %1826 = vmatprep.subr.mxu0 0.0
    %1827 = vmatpush1.msra.mxu0 0.0
    %1828 = vmatprep.subr.mxu0 0.0
    %1829 = vmatpush1.msra.mxu0 0.0
    %1830 = vmatprep.subr.mxu0 0.0
    %1831 = vmatpush1.msra.mxu0 0.0
    %1832 = vmatprep.subr.mxu0 0.0
    %1833 = vmatpush1.msra.mxu0 0.0
    %1834 = vmatprep.subr.mxu0 0.0
    %1835 = vmatpush1.msra.mxu0 0.0
    %1836 = vmatprep.subr.mxu0 0.0
    %1837 = vmatpush1.msra.mxu0 0.0
    %1838 = vmatprep.subr.mxu0 0.0
    %1839 = vmatpush1.msra.mxu0 0.0
    %1840 = vmatprep.subr.mxu0 0.0
    %1841 = vmatpush1.msra.mxu0 0.0
    %1842 = vmatprep.subr.mxu0 0.0
    %1843 = vmatpush1.msra.mxu0 0.0
    %1844 = vmatprep.subr.mxu0 0.0
    %1845 = vmatpush1.msra.mxu0 0.0
    %1846 = vmatprep.subr.mxu0 0.0
    %1847 = vmatpush1.msra.mxu0 0.0
    %1848 = vmatprep.subr.mxu0 0.0
    %1849 = vmatpush1.msra.mxu0 0.0
    %1850 = vmatprep.subr.mxu0 0.0
    %1851 = vmatpush1.msra.mxu0 0.0
    %1852 = vmatprep.subr.mxu0 0.0
    %1853 = vmatpush1.msra.mxu0 0.0
    %1854 = vmatprep.subr.mxu0 0.0
    %1855 = vmatpush1.msra.mxu0 0.0
    %1856 = vmatprep.subr.mxu0 0.0
    %1857 = vmatpush1.msra.mxu0 0.0
    %1858 = vmatprep.mubr.f32.mxu0 0.0
    %1859 = vmatmul.mubr.f32.gmra.mrb[0].mxu0 %v1792
    %v1860 = vpop.f32.mrb[0].mxu0
    %v1861 = vadd.f32 %v1788, %v1860
    %v1862 = vpop.f32.mrb[0].mxu0
    %1863 = vdwg.mxu0
    %1864 = vrot.lane.b32.xlu0 %v417, 112
    %v1865 = vpop.permute.xlu0 %1864
    %1866 = vrot.lane.b32.xlu0 %v229, 112
    %v1867 = vpop.permute.xlu0 %1866
    %v1868 = vsel %vm425, %v1865, 0
    %v1870 = vsel %vm425, %v1867, 0
    %1872 = vmatprep.subr.mxu0 0.0
    %1873 = vmatpush1.xpose.msra.mxu0 %v1870
    %1874 = vmatprep.subr.mxu0 0.0
    %1875 = vmatpush1.xpose.msra.mxu0 0.0
    %1876 = vmatprep.subr.mxu0 0.0
    %1877 = vmatpush1.xpose.msra.mxu0 0.0
    %1878 = vmatprep.subr.mxu0 0.0
    %1879 = vmatpush1.xpose.msra.mxu0 0.0
    %1880 = vmatprep.subr.mxu0 0.0
    %1881 = vmatpush1.xpose.msra.mxu0 0.0
    %1882 = vmatprep.subr.mxu0 0.0
    %1883 = vmatpush1.xpose.msra.mxu0 0.0
    %1884 = vmatprep.subr.mxu0 0.0
    %1885 = vmatpush1.xpose.msra.mxu0 0.0
    %1886 = vmatprep.subr.mxu0 0.0
    %1887 = vmatpush1.xpose.msra.mxu0 0.0
    %1888 = vmatprep.subr.mxu0 0.0
    %1889 = vmatpush1.xpose.msra.mxu0 0.0
    %1890 = vmatprep.subr.mxu0 0.0
    %1891 = vmatpush1.xpose.msra.mxu0 0.0
    %1892 = vmatprep.subr.mxu0 0.0
    %1893 = vmatpush1.xpose.msra.mxu0 0.0
    %1894 = vmatprep.subr.mxu0 0.0
    %1895 = vmatpush1.xpose.msra.mxu0 0.0
    %1896 = vmatprep.subr.mxu0 0.0
    %1897 = vmatpush1.xpose.msra.mxu0 0.0
    %1898 = vmatprep.subr.mxu0 0.0
    %1899 = vmatpush1.xpose.msra.mxu0 0.0
    %1900 = vmatprep.subr.mxu0 0.0
    %1901 = vmatpush1.xpose.msra.mxu0 0.0
    %1902 = vmatprep.subr.mxu0 0.0
    %1903 = vmatpush1.xpose.msra.mxu0 0.0
    %1904 = vmatprep.subr.mxu0 0.0
    %1905 = vmatpush1.xpose.msra.mxu0 0.0
    %1906 = vmatprep.subr.mxu0 0.0
    %1907 = vmatpush1.xpose.msra.mxu0 0.0
    %1908 = vmatprep.subr.mxu0 0.0
    %1909 = vmatpush1.xpose.msra.mxu0 0.0
    %1910 = vmatprep.subr.mxu0 0.0
    %1911 = vmatpush1.xpose.msra.mxu0 0.0
    %1912 = vmatprep.subr.mxu0 0.0
    %1913 = vmatpush1.xpose.msra.mxu0 0.0
    %1914 = vmatprep.subr.mxu0 0.0
    %1915 = vmatpush1.xpose.msra.mxu0 0.0
    %1916 = vmatprep.subr.mxu0 0.0
    %1917 = vmatpush1.xpose.msra.mxu0 0.0
    %1918 = vmatprep.subr.mxu0 0.0
    %1919 = vmatpush1.xpose.msra.mxu0 0.0
    %1920 = vmatprep.subr.mxu0 0.0
    %1921 = vmatpush1.xpose.msra.mxu0 0.0
    %1922 = vmatprep.subr.mxu0 0.0
    %1923 = vmatpush1.xpose.msra.mxu0 0.0
    %1924 = vmatprep.subr.mxu0 0.0
    %1925 = vmatpush1.xpose.msra.mxu0 0.0
    %1926 = vmatprep.subr.mxu0 0.0
    %1927 = vmatpush1.xpose.msra.mxu0 0.0
    %1928 = vmatprep.subr.mxu0 0.0
    %1929 = vmatpush1.xpose.msra.mxu0 0.0
    %1930 = vmatprep.subr.mxu0 0.0
    %1931 = vmatpush1.xpose.msra.mxu0 0.0
    %1932 = vmatprep.subr.mxu0 0.0
    %1933 = vmatpush1.xpose.msra.mxu0 0.0
    %1934 = vmatprep.subr.mxu0 0.0
    %1935 = vmatpush1.xpose.msra.mxu0 0.0
    %1936 = vmatprep.mubr.f32.mxu0 0.0
    %1937 = vmatmul.mubr.f32.gmra.mrb[0].mxu0 %v1868
    %v1938 = vpop.f32.mrb[0].mxu0
    %v1939 = vadd.f32 0.0, %v1938
    %v1940 = vpop.f32.mrb[0].mxu0
    %1941 = vdwg.mxu0
    %v1942 = vsel %vm1389, -3.4028235e+38, %v1939
    %v1943 = vsel %vm425, %v1942, -inf
    %1944 = vmax.xlane.f32.xlu0 %v1943
    %v1945 = vpop.xlane.xlu0 %1944
    %v1946 = vsub.f32 %v1942, %v1945
    %v1947 = vmul.f32 %v1946, 1.442695
    %v1948 = vpow.pop %v1947
    %v1949 = vsel %vm425, %v1948, 0.0
    %1950 = vadd.xlane.f32.xlu0 %v1949
    %v1951 = vpop.xlane.xlu0 %1950
    %v1952 = vrcp.pop %v1951
    %v1953 = vmul.f32 %v1948, %v1952
    %1954 = vrot.lane.b32.xlu0 %v321, 112
    %v1955 = vpop.permute.xlu0 %1954
    %v1958 = vsel %vm425, %v1953, 0
    %1960 = vmatprep.subr.mxu0 0.0
    %1961 = vmatpush1.msra.mxu0 %v1955
    %1962 = vmatprep.subr.mxu0 0.0
    %1963 = vmatpush1.msra.mxu0 0.0
    %1964 = vmatprep.subr.mxu0 0.0
    %1965 = vmatpush1.msra.mxu0 0.0
    %1966 = vmatprep.subr.mxu0 0.0
    %1967 = vmatpush1.msra.mxu0 0.0
    %1968 = vmatprep.subr.mxu0 0.0
    %1969 = vmatpush1.msra.mxu0 0.0
    %1970 = vmatprep.subr.mxu0 0.0
    %1971 = vmatpush1.msra.mxu0 0.0
    %1972 = vmatprep.subr.mxu0 0.0
    %1973 = vmatpush1.msra.mxu0 0.0
    %1974 = vmatprep.subr.mxu0 0.0
    %1975 = vmatpush1.msra.mxu0 0.0
    %1976 = vmatprep.subr.mxu0 0.0
    %1977 = vmatpush1.msra.mxu0 0.0
    %1978 = vmatprep.subr.mxu0 0.0
    %1979 = vmatpush1.msra.mxu0 0.0
    %1980 = vmatprep.subr.mxu0 0.0
    %1981 = vmatpush1.msra.mxu0 0.0
    %1982 = vmatprep.subr.mxu0 0.0
    %1983 = vmatpush1.msra.mxu0 0.0
    %1984 = vmatprep.subr.mxu0 0.0
    %1985 = vmatpush1.msra.mxu0 0.0
    %1986 = vmatprep.subr.mxu0 0.0
    %1987 = vmatpush1.msra.mxu0 0.0
    %1988 = vmatprep.subr.mxu0 0.0
    %1989 = vmatpush1.msra.mxu0 0.0
    %1990 = vmatprep.subr.mxu0 0.0
    %1991 = vmatpush1.msra.mxu0 0.0
    %1992 = vmatprep.subr.mxu0 0.0
    %1993 = vmatpush1.msra.mxu0 0.0
    %1994 = vmatprep.subr.mxu0 0.0
    %1995 = vmatpush1.msra.mxu0 0.0
    %1996 = vmatprep.subr.mxu0 0.0
    %1997 = vmatpush1.msra.mxu0 0.0
    %1998 = vmatprep.subr.mxu0 0.0
    %1999 = vmatpush1.msra.mxu0 0.0
    %2000 = vmatprep.subr.mxu0 0.0
    %2001 = vmatpush1.msra.mxu0 0.0
    %2002 = vmatprep.subr.mxu0 0.0
    %2003 = vmatpush1.msra.mxu0 0.0
    %2004 = vmatprep.subr.mxu0 0.0
    %2005 = vmatpush1.msra.mxu0 0.0
    %2006 = vmatprep.subr.mxu0 0.0
    %2007 = vmatpush1.msra.mxu0 0.0
    %2008 = vmatprep.subr.mxu0 0.0
    %2009 = vmatpush1.msra.mxu0 0.0
    %2010 = vmatprep.subr.mxu0 0.0
    %2011 = vmatpush1.msra.mxu0 0.0
    %2012 = vmatprep.subr.mxu0 0.0
    %2013 = vmatpush1.msra.mxu0 0.0
    %2014 = vmatprep.subr.mxu0 0.0
    %2015 = vmatpush1.msra.mxu0 0.0
    %2016 = vmatprep.subr.mxu0 0.0
    %2017 = vmatpush1.msra.mxu0 0.0
    %2018 = vmatprep.subr.mxu0 0.0
    %2019 = vmatpush1.msra.mxu0 0.0
    %2020 = vmatprep.subr.mxu0 0.0
    %2021 = vmatpush1.msra.mxu0 0.0
    %2022 = vmatprep.subr.mxu0 0.0
    %2023 = vmatpush1.msra.mxu0 0.0
    %2024 = vmatprep.mubr.f32.mxu0 0.0
    %2025 = vmatmul.mubr.f32.gmra.mrb[0].mxu0 %v1958
    %v2026 = vpop.f32.mrb[0].mxu0
    %v2027 = vadd.f32 0.0, %v2026
    %v2028 = vpop.f32.mrb[0].mxu0
    %2029 = vdwg.mxu0
    %v2031 = vsel %vm425, %v2027, 0
    %2033 = vmatprep.subr.mxu0 0.0
    %2034 = vmatpush1.msra.mxu0 %v420
    %2035 = vmatprep.subr.mxu0 0.0
    %2036 = vmatpush1.msra.mxu0 0.0
    %2037 = vmatprep.subr.mxu0 0.0
    %2038 = vmatpush1.msra.mxu0 0.0
    %2039 = vmatprep.subr.mxu0 0.0
    %2040 = vmatpush1.msra.mxu0 0.0
    %2041 = vmatprep.subr.mxu0 0.0
    %2042 = vmatpush1.msra.mxu0 0.0
    %2043 = vmatprep.subr.mxu0 0.0
    %2044 = vmatpush1.msra.mxu0 0.0
    %2045 = vmatprep.subr.mxu0 0.0
    %2046 = vmatpush1.msra.mxu0 0.0
    %2047 = vmatprep.subr.mxu0 0.0
    %2048 = vmatpush1.msra.mxu0 0.0
    %2049 = vmatprep.subr.mxu0 0.0
    %2050 = vmatpush1.msra.mxu0 0.0
    %2051 = vmatprep.subr.mxu0 0.0
    %2052 = vmatpush1.msra.mxu0 0.0
    %2053 = vmatprep.subr.mxu0 0.0
    %2054 = vmatpush1.msra.mxu0 0.0
    %2055 = vmatprep.subr.mxu0 0.0
    %2056 = vmatpush1.msra.mxu0 0.0
    %2057 = vmatprep.subr.mxu0 0.0
    %2058 = vmatpush1.msra.mxu0 0.0
    %2059 = vmatprep.subr.mxu0 0.0
    %2060 = vmatpush1.msra.mxu0 0.0
    %2061 = vmatprep.subr.mxu0 0.0
    %2062 = vmatpush1.msra.mxu0 0.0
    %2063 = vmatprep.subr.mxu0 0.0
    %2064 = vmatpush1.msra.mxu0 0.0
    %2065 = vmatprep.subr.mxu0 0.0
    %2066 = vmatpush1.msra.mxu0 0.0
    %2067 = vmatprep.subr.mxu0 0.0
    %2068 = vmatpush1.msra.mxu0 0.0
    %2069 = vmatprep.subr.mxu0 0.0
    %2070 = vmatpush1.msra.mxu0 0.0
    %2071 = vmatprep.subr.mxu0 0.0
    %2072 = vmatpush1.msra.mxu0 0.0
    %2073 = vmatprep.subr.mxu0 0.0
    %2074 = vmatpush1.msra.mxu0 0.0
    %2075 = vmatprep.subr.mxu0 0.0
    %2076 = vmatpush1.msra.mxu0 0.0
    %2077 = vmatprep.subr.mxu0 0.0
    %2078 = vmatpush1.msra.mxu0 0.0
    %2079 = vmatprep.subr.mxu0 0.0
    %2080 = vmatpush1.msra.mxu0 0.0
    %2081 = vmatprep.subr.mxu0 0.0
    %2082 = vmatpush1.msra.mxu0 0.0
    %2083 = vmatprep.subr.mxu0 0.0
    %2084 = vmatpush1.msra.mxu0 0.0
    %2085 = vmatprep.subr.mxu0 0.0
    %2086 = vmatpush1.msra.mxu0 0.0
    %2087 = vmatprep.subr.mxu0 0.0
    %2088 = vmatpush1.msra.mxu0 0.0
    %2089 = vmatprep.subr.mxu0 0.0
    %2090 = vmatpush1.msra.mxu0 0.0
    %2091 = vmatprep.subr.mxu0 0.0
    %2092 = vmatpush1.msra.mxu0 0.0
    %2093 = vmatprep.subr.mxu0 0.0
    %2094 = vmatpush1.msra.mxu0 0.0
    %2095 = vmatprep.subr.mxu0 0.0
    %2096 = vmatpush1.msra.mxu0 0.0
    %2097 = vmatprep.mubr.f32.mxu0 0.0
    %2098 = vmatmul.mubr.f32.gmra.mrb[0].mxu0 %v2031
    %v2099 = vpop.f32.mrb[0].mxu0
    %v2100 = vadd.f32 0.0, %v2099
    %v2101 = vpop.f32.mrb[0].mxu0
    %2102 = vdwg.mxu0
    %v2103 = vadd.f32 %v1861, %v2100
    %2104 = vrot.lane.b32.xlu0 %v417, 104
    %v2105 = vpop.permute.xlu0 %2104
    %2106 = vrot.lane.b32.xlu0 %v229, 104
    %v2107 = vpop.permute.xlu0 %2106
    %v2108 = vsel %vm425, %v2105, 0
    %v2110 = vsel %vm425, %v2107, 0
    %2112 = vmatprep.subr.mxu0 0.0
    %2113 = vmatpush1.xpose.msra.mxu0 %v2110
    %2114 = vmatprep.subr.mxu0 0.0
    %2115 = vmatpush1.xpose.msra.mxu0 0.0
    %2116 = vmatprep.subr.mxu0 0.0
    %2117 = vmatpush1.xpose.msra.mxu0 0.0
    %2118 = vmatprep.subr.mxu0 0.0
    %2119 = vmatpush1.xpose.msra.mxu0 0.0
    %2120 = vmatprep.subr.mxu0 0.0
    %2121 = vmatpush1.xpose.msra.mxu0 0.0
    %2122 = vmatprep.subr.mxu0 0.0
    %2123 = vmatpush1.xpose.msra.mxu0 0.0
    %2124 = vmatprep.subr.mxu0 0.0
    %2125 = vmatpush1.xpose.msra.mxu0 0.0
    %2126 = vmatprep.subr.mxu0 0.0
    %2127 = vmatpush1.xpose.msra.mxu0 0.0
    %2128 = vmatprep.subr.mxu0 0.0
    %2129 = vmatpush1.xpose.msra.mxu0 0.0
    %2130 = vmatprep.subr.mxu0 0.0
    %2131 = vmatpush1.xpose.msra.mxu0 0.0
    %2132 = vmatprep.subr.mxu0 0.0
    %2133 = vmatpush1.xpose.msra.mxu0 0.0
    %2134 = vmatprep.subr.mxu0 0.0
    %2135 = vmatpush1.xpose.msra.mxu0 0.0
    %2136 = vmatprep.subr.mxu0 0.0
    %2137 = vmatpush1.xpose.msra.mxu0 0.0
    %2138 = vmatprep.subr.mxu0 0.0
    %2139 = vmatpush1.xpose.msra.mxu0 0.0
    %2140 = vmatprep.subr.mxu0 0.0
    %2141 = vmatpush1.xpose.msra.mxu0 0.0
    %2142 = vmatprep.subr.mxu0 0.0
    %2143 = vmatpush1.xpose.msra.mxu0 0.0
    %2144 = vmatprep.subr.mxu0 0.0
    %2145 = vmatpush1.xpose.msra.mxu0 0.0
    %2146 = vmatprep.subr.mxu0 0.0
    %2147 = vmatpush1.xpose.msra.mxu0 0.0
    %2148 = vmatprep.subr.mxu0 0.0
    %2149 = vmatpush1.xpose.msra.mxu0 0.0
    %2150 = vmatprep.subr.mxu0 0.0
    %2151 = vmatpush1.xpose.msra.mxu0 0.0
    %2152 = vmatprep.subr.mxu0 0.0
    %2153 = vmatpush1.xpose.msra.mxu0 0.0
    %2154 = vmatprep.subr.mxu0 0.0
    %2155 = vmatpush1.xpose.msra.mxu0 0.0
    %2156 = vmatprep.subr.mxu0 0.0
    %2157 = vmatpush1.xpose.msra.mxu0 0.0
    %2158 = vmatprep.subr.mxu0 0.0
    %2159 = vmatpush1.xpose.msra.mxu0 0.0
    %2160 = vmatprep.subr.mxu0 0.0
    %2161 = vmatpush1.xpose.msra.mxu0 0.0
    %2162 = vmatprep.subr.mxu0 0.0
    %2163 = vmatpush1.xpose.msra.mxu0 0.0
    %2164 = vmatprep.subr.mxu0 0.0
    %2165 = vmatpush1.xpose.msra.mxu0 0.0
    %2166 = vmatprep.subr.mxu0 0.0
    %2167 = vmatpush1.xpose.msra.mxu0 0.0
    %2168 = vmatprep.subr.mxu0 0.0
    %2169 = vmatpush1.xpose.msra.mxu0 0.0
    %2170 = vmatprep.subr.mxu0 0.0
    %2171 = vmatpush1.xpose.msra.mxu0 0.0
    %2172 = vmatprep.subr.mxu0 0.0
    %2173 = vmatpush1.xpose.msra.mxu0 0.0
    %2174 = vmatprep.subr.mxu0 0.0
    %2175 = vmatpush1.xpose.msra.mxu0 0.0
    %2176 = vmatprep.mubr.f32.mxu0 0.0
    %2177 = vmatmul.mubr.f32.gmra.mrb[0].mxu0 %v2108
    %v2178 = vpop.f32.mrb[0].mxu0
    %v2179 = vadd.f32 0.0, %v2178
    %v2180 = vpop.f32.mrb[0].mxu0
    %2181 = vdwg.mxu0
    %v2182 = vsel %vm1389, -3.4028235e+38, %v2179
    %v2183 = vsel %vm425, %v2182, -inf
    %2184 = vmax.xlane.f32.xlu0 %v2183
    %v2185 = vpop.xlane.xlu0 %2184
    %v2186 = vsub.f32 %v2182, %v2185
    %v2187 = vmul.f32 %v2186, 1.442695
    %v2188 = vpow.pop %v2187
    %v2189 = vsel %vm425, %v2188, 0.0
    %2190 = vadd.xlane.f32.xlu0 %v2189
    %v2191 = vpop.xlane.xlu0 %2190
    %v2192 = vrcp.pop %v2191
    %v2193 = vmul.f32 %v2188, %v2192
    %2194 = vrot.lane.b32.xlu0 %v321, 104
    %v2195 = vpop.permute.xlu0 %2194
    %v2198 = vsel %vm425, %v2193, 0
    %2200 = vmatprep.subr.mxu0 0.0
    %2201 = vmatpush1.msra.mxu0 %v2195
    %2202 = vmatprep.subr.mxu0 0.0
    %2203 = vmatpush1.msra.mxu0 0.0
    %2204 = vmatprep.subr.mxu0 0.0
    %2205 = vmatpush1.msra.mxu0 0.0
    %2206 = vmatprep.subr.mxu0 0.0
    %2207 = vmatpush1.msra.mxu0 0.0
    %2208 = vmatprep.subr.mxu0 0.0
    %2209 = vmatpush1.msra.mxu0 0.0
    %2210 = vmatprep.subr.mxu0 0.0
    %2211 = vmatpush1.msra.mxu0 0.0
    %2212 = vmatprep.subr.mxu0 0.0
    %2213 = vmatpush1.msra.mxu0 0.0
    %2214 = vmatprep.subr.mxu0 0.0
    %2215 = vmatpush1.msra.mxu0 0.0
    %2216 = vmatprep.subr.mxu0 0.0
    %2217 = vmatpush1.msra.mxu0 0.0
    %2218 = vmatprep.subr.mxu0 0.0
    %2219 = vmatpush1.msra.mxu0 0.0
    %2220 = vmatprep.subr.mxu0 0.0
    %2221 = vmatpush1.msra.mxu0 0.0
    %2222 = vmatprep.subr.mxu0 0.0
    %2223 = vmatpush1.msra.mxu0 0.0
    %2224 = vmatprep.subr.mxu0 0.0
    %2225 = vmatpush1.msra.mxu0 0.0
    %2226 = vmatprep.subr.mxu0 0.0
    %2227 = vmatpush1.msra.mxu0 0.0
    %2228 = vmatprep.subr.mxu0 0.0
    %2229 = vmatpush1.msra.mxu0 0.0
    %2230 = vmatprep.subr.mxu0 0.0
    %2231 = vmatpush1.msra.mxu0 0.0
    %2232 = vmatprep.subr.mxu0 0.0
    %2233 = vmatpush1.msra.mxu0 0.0
    %2234 = vmatprep.subr.mxu0 0.0
    %2235 = vmatpush1.msra.mxu0 0.0
    %2236 = vmatprep.subr.mxu0 0.0
    %2237 = vmatpush1.msra.mxu0 0.0
    %2238 = vmatprep.subr.mxu0 0.0
    %2239 = vmatpush1.msra.mxu0 0.0
    %2240 = vmatprep.subr.mxu0 0.0
    %2241 = vmatpush1.msra.mxu0 0.0
    %2242 = vmatprep.subr.mxu0 0.0
    %2243 = vmatpush1.msra.mxu0 0.0
    %2244 = vmatprep.subr.mxu0 0.0
    %2245 = vmatpush1.msra.mxu0 0.0
    %2246 = vmatprep.subr.mxu0 0.0
    %2247 = vmatpush1.msra.mxu0 0.0
    %2248 = vmatprep.subr.mxu0 0.0
    %2249 = vmatpush1.msra.mxu0 0.0
    %2250 = vmatprep.subr.mxu0 0.0
    %2251 = vmatpush1.msra.mxu0 0.0
    %2252 = vmatprep.subr.mxu0 0.0
    %2253 = vmatpush1.msra.mxu0 0.0
    %2254 = vmatprep.subr.mxu0 0.0
    %2255 = vmatpush1.msra.mxu0 0.0
    %2256 = vmatprep.subr.mxu0 0.0
    %2257 = vmatpush1.msra.mxu0 0.0
    %2258 = vmatprep.subr.mxu0 0.0
    %2259 = vmatpush1.msra.mxu0 0.0
    %2260 = vmatprep.subr.mxu0 0.0
    %2261 = vmatpush1.msra.mxu0 0.0
    %2262 = vmatprep.subr.mxu0 0.0
    %2263 = vmatpush1.msra.mxu0 0.0
    %2264 = vmatprep.mubr.f32.mxu0 0.0
    %2265 = vmatmul.mubr.f32.gmra.mrb[0].mxu0 %v2198
    %v2266 = vpop.f32.mrb[0].mxu0
    %v2267 = vadd.f32 0.0, %v2266
    %v2268 = vpop.f32.mrb[0].mxu0
    %2269 = vdwg.mxu0
    %v2271 = vsel %vm425, %v2267, 0
    %2273 = vmatprep.subr.mxu0 0.0
    %2274 = vmatpush1.msra.mxu0 %v421
    %2275 = vmatprep.subr.mxu0 0.0
    %2276 = vmatpush1.msra.mxu0 0.0
    %2277 = vmatprep.subr.mxu0 0.0
    %2278 = vmatpush1.msra.mxu0 0.0
    %2279 = vmatprep.subr.mxu0 0.0
    %2280 = vmatpush1.msra.mxu0 0.0
    %2281 = vmatprep.subr.mxu0 0.0
    %2282 = vmatpush1.msra.mxu0 0.0
    %2283 = vmatprep.subr.mxu0 0.0
    %2284 = vmatpush1.msra.mxu0 0.0
    %2285 = vmatprep.subr.mxu0 0.0
    %2286 = vmatpush1.msra.mxu0 0.0
    %2287 = vmatprep.subr.mxu0 0.0
    %2288 = vmatpush1.msra.mxu0 0.0
    %2289 = vmatprep.subr.mxu0 0.0
    %2290 = vmatpush1.msra.mxu0 0.0
    %2291 = vmatprep.subr.mxu0 0.0
    %2292 = vmatpush1.msra.mxu0 0.0
    %2293 = vmatprep.subr.mxu0 0.0
    %2294 = vmatpush1.msra.mxu0 0.0
    %2295 = vmatprep.subr.mxu0 0.0
    %2296 = vmatpush1.msra.mxu0 0.0
    %2297 = vmatprep.subr.mxu0 0.0
    %2298 = vmatpush1.msra.mxu0 0.0
    %2299 = vmatprep.subr.mxu0 0.0
    %2300 = vmatpush1.msra.mxu0 0.0
    %2301 = vmatprep.subr.mxu0 0.0
    %2302 = vmatpush1.msra.mxu0 0.0
    %2303 = vmatprep.subr.mxu0 0.0
    %2304 = vmatpush1.msra.mxu0 0.0
    %2305 = vmatprep.subr.mxu0 0.0
    %2306 = vmatpush1.msra.mxu0 0.0
    %2307 = vmatprep.subr.mxu0 0.0
    %2308 = vmatpush1.msra.mxu0 0.0
    %2309 = vmatprep.subr.mxu0 0.0
    %2310 = vmatpush1.msra.mxu0 0.0
    %2311 = vmatprep.subr.mxu0 0.0
    %2312 = vmatpush1.msra.mxu0 0.0
    %2313 = vmatprep.subr.mxu0 0.0
    %2314 = vmatpush1.msra.mxu0 0.0
    %2315 = vmatprep.subr.mxu0 0.0
    %2316 = vmatpush1.msra.mxu0 0.0
    %2317 = vmatprep.subr.mxu0 0.0
    %2318 = vmatpush1.msra.mxu0 0.0
    %2319 = vmatprep.subr.mxu0 0.0
    %2320 = vmatpush1.msra.mxu0 0.0
    %2321 = vmatprep.subr.mxu0 0.0
    %2322 = vmatpush1.msra.mxu0 0.0
    %2323 = vmatprep.subr.mxu0 0.0
    %2324 = vmatpush1.msra.mxu0 0.0
    %2325 = vmatprep.subr.mxu0 0.0
    %2326 = vmatpush1.msra.mxu0 0.0
    %2327 = vmatprep.subr.mxu0 0.0
    %2328 = vmatpush1.msra.mxu0 0.0
    %2329 = vmatprep.subr.mxu0 0.0
    %2330 = vmatpush1.msra.mxu0 0.0
    %2331 = vmatprep.subr.mxu0 0.0
    %2332 = vmatpush1.msra.mxu0 0.0
    %2333 = vmatprep.subr.mxu0 0.0
    %2334 = vmatpush1.msra.mxu0 0.0
    %2335 = vmatprep.subr.mxu0 0.0
    %2336 = vmatpush1.msra.mxu0 0.0
    %2337 = vmatprep.mubr.f32.mxu0 0.0
    %2338 = vmatmul.mubr.f32.gmra.mrb[0].mxu0 %v2271
    %v2339 = vpop.f32.mrb[0].mxu0
    %v2340 = vadd.f32 0.0, %v2339
    %v2341 = vpop.f32.mrb[0].mxu0
    %2342 = vdwg.mxu0
    %v2343 = vadd.f32 %v2103, %v2340
    %v2344 = vadd.f32 %v2343, %v1384
    %vm2345 = vcmask 261120
    %2346 = vst.msk [vmem:[#allocation14] sm:$0xff] %vm2345, %v1386
    %2347 = vst.msk [vmem:[#allocation14 + $0x8] sm:$0xff] %vm2345, %v2344
    %2348 = vst.msk [vmem:[%s13] sm:$0xff] %vm425, %v513
    %2349 = vst.msk [vmem:[%s13 + $0x8] sm:$0xff] %vm425, %v676
    %2350 = vst.msk [vmem:[%s13 + $0x10] sm:$0xff] %vm425, %v989
    %2351 = vst.msk [vmem:[%s13 + $0x18] sm:$0xff] %vm425, %v1229
    %2352 = vst.msk [vmem:[%s13 + $0x20] sm:$0xff] %vm425, %v1477
    %2353 = vst.msk [vmem:[%s13 + $0x28] sm:$0xff] %vm425, %v1640
    %2354 = vst.msk [vmem:[%s13 + $0x30] sm:$0xff] %vm425, %v1953
    %2355 = vst.msk [vmem:[%s13 + $0x38] sm:$0xff] %vm425, %v2193
    // Predicated region
    $region78: #{tpu_custom_call.1} parent=1 // pred_check
      _
    $region79: #{tpu_custom_call.1} parent=1 // pred_check_branch
      %2357 = sbr.rel (0) target = $region81
    $region80: #{tpu_custom_call.1} parent=1 // pred_region
      %s2359 = ssub.s32 256, 256
      %2360 = vsyncadd [#allocation4], %s2359
      %s2361 = sshll.u32 [#allocation14], 4
      %s2362 = int_to_ptr.vmem [resolvable:$true] %s2361
      %2367 = dma.vmem_to_hbm [thread:$0]  %s2362, 256, %s12, [#allocation4], 128, 128, 8
    $region81: #{tpu_custom_call.1} parent=1 // pred_fallthru
      _
    // Predicated region
    $region82: #{tpu_custom_call.1} parent=1 // pred_check
      _
    $region83: #{tpu_custom_call.1} parent=1 // pred_check_branch
      %2369 = sbr.rel (0) target = $region85
    $region84: #{tpu_custom_call.1} parent=1 // pred_region
      _
    $region85: #{tpu_custom_call.1} parent=1 // pred_fallthru
      _
    // Predicated region
    $region86: #{tpu_custom_call.1} parent=1 // pred_check
      _
    $region87: #{tpu_custom_call.1} parent=1 // pred_check_branch
      %2371 = sbr.rel (0) target = $region89
    $region88: #{tpu_custom_call.1} parent=1 // pred_region
      %2372 = dma.done [#allocation4], 256
    $region89: #{tpu_custom_call.1} parent=1 // pred_fallthru
      _
    // Predicated region
    $region90: #{tpu_custom_call.1} parent=1 // pred_check
      _
    $region91: #{tpu_custom_call.1} parent=1 // pred_check_branch
      %2374 = sbr.rel (0) target = $region93
    $region92: #{tpu_custom_call.1} parent=1 // pred_region
      _
    $region93: #{tpu_custom_call.1} parent=1 // pred_fallthru
      _
    %2375 = vsyncpa [#allocation3], 1
    %2376 = vsyncpa [#allocation6], 1
    %2377 = vsyncpa [#allocation9], 1
    %2378 = vsyncpa [#allocation12], 1
    %2379 = vsyncpa [#allocation4], 1

</llo_original>
